<compile_context>
chip_gen: v6e
topology: v6e:2x2x1
jax: 0.10.0
libtpu: 0.0.40
codegen_flags: <defaults>
</compile_context>

<pallas_src>
import functools
import math

import jax
import jax.numpy as jnp
from jax.experimental import pallas as pl
from jax.experimental.pallas import tpu as pltpu


# ---------------------------------------------------------------------------
# Small helpers (shared by kernel and reference)
# ---------------------------------------------------------------------------
def _layer_norm(z, gamma, beta, eps=1e-5):
    mu = jnp.mean(z, axis=-1, keepdims=True)
    var = jnp.mean((z - mu) ** 2, axis=-1, keepdims=True)
    return (z - mu) * jax.lax.rsqrt(var + eps) * gamma + beta


def _split_heads(t, nhead, hd):
    # (S, nhead*hd) -> (nhead, S, hd).  Static lane slices + leading-axis stack
    # (well-supported relayout); runs once per batch (q-tile 0), not per step.
    return jnp.stack([t[:, h * hd:(h + 1) * hd] for h in range(nhead)], axis=0)


# ---------------------------------------------------------------------------
# Kernel
# ---------------------------------------------------------------------------
def _encoder_kernel(nhead, head_dim, d_model, tq,
                    src_ref, pos_ref,
                    wqk_ref, bqk_ref, wv_ref, bv_ref,
                    wo_ref, bo_ref,
                    w1_ref, b1_ref, w2_ref, b2_ref,
                    g1_ref, be1_ref, g2_ref, be2_ref,
                    out_ref,
                    q_sc, k_sc, v_sc):
    f32, bf16 = jnp.float32, jnp.bfloat16
    D, hd = d_model, head_dim
    qi = pl.program_id(1)

    # --- once per batch block: project Q/K/V for the whole sequence into
    #     head-major bf16 scratch (persists across the sequential q-tile axis).
    @pl.when(qi == 0)
    def _():
        x_all = src_ref[0]                                    # (S, D) f32
        qk_in = (x_all + pos_ref[0]).astype(bf16)             # q = k = src + pos
        # fused Q|K projection; 1/sqrt(hd) already folded into the q columns
        qk = jnp.dot(qk_in, wqk_ref[...],
                     preferred_element_type=f32) + bqk_ref[...]        # (S, 2D)
        v = jnp.dot(x_all.astype(bf16), wv_ref[...],
                    preferred_element_type=f32) + bv_ref[...]          # (S, D)
        q_sc[...] = _split_heads(qk[:, :D].astype(bf16), nhead, hd)
        k_sc[...] = _split_heads(qk[:, D:].astype(bf16), nhead, hd)
        v_sc[...] = _split_heads(v.astype(bf16), nhead, hd)

    # --- per q-tile: attention + FFN ---------------------------------------
    q0 = pl.multiple_of(qi * tq, tq)
    xq = src_ref[0, pl.ds(q0, tq), :]                         # (tq, D) residual, f32
    qh = q_sc[:, pl.ds(q0, tq), :]                            # (nhead, tq, hd) bf16

    s = jnp.einsum("hqe,hke->hqk", qh, k_sc[...],
                   preferred_element_type=f32)                # (nhead, tq, S)
    s = s - jnp.max(s, axis=-1, keepdims=True)
    s = jnp.exp(s)                                            # exp in place
    probs = (s * pl.reciprocal(jnp.sum(s, axis=-1, keepdims=True),
                               approx=True)).astype(bf16)     # (nhead, tq, S) bf16
    ctx = jnp.einsum("hqk,hke->hqe", probs, v_sc[...],
                     preferred_element_type=f32)              # (nhead, tq, hd)

    # collapse heads -> one (tq, D) @ (D, D) out-projection (full K=D MXU fill)
    ctx_flat = jnp.concatenate([ctx[h].astype(bf16) for h in range(nhead)],
                               axis=-1)                       # (tq, D) bf16
    attn = jnp.dot(ctx_flat, wo_ref[...],
                   preferred_element_type=f32) + bo_ref[...]  # (tq, D) f32

    # residual + norm1 (dropout1 identity in eval mode)
    x1 = _layer_norm(xq + attn, g1_ref[...], be1_ref[...])

    # feed-forward; hidden kept bf16
    h = jnp.dot(x1.astype(bf16), w1_ref[...],
                preferred_element_type=f32) + b1_ref[...]
    h = jnp.maximum(h, 0.0).astype(bf16)                      # relu
    h = jnp.dot(h, w2_ref[...], preferred_element_type=f32) + b2_ref[...]

    # residual + norm2 (dropout / dropout2 identity in eval mode)
    x2 = _layer_norm(x1 + h, g2_ref[...], be2_ref[...])
    out_ref[0] = x2.astype(out_ref.dtype)


# ---------------------------------------------------------------------------
# Wrapper-side helpers
# ---------------------------------------------------------------------------
def _choose_tq(S, tq=None):
    if tq is not None:
        if S % tq != 0 or not (tq == S or tq % 8 == 0):
            raise ValueError(f"tq={tq} must divide S={S} and be a multiple of 8")
        return tq
    if S <= 128:
        return S
    for cand in range(128, 7, -8):           # largest multiple-of-8 divisor <= 128
        if S % cand == 0:
            return cand
    return S                                  # no clean divisor -> whole sequence


def _vmem_limit_bytes(S, D, dff, nhead, tq):
    bf, f4 = 2, 4
    hd = D // nhead
    weights = bf * (D * 2 * D + 2 * D * D + D * dff + dff * D) \
        + f4 * (2 * D + dff + 7 * D)
    scratch = 3 * nhead * S * hd * bf                     # q/k/v head scratch
    io = 2 * (2 * S * D * f4) + 2 * (tq * D * f4)         # src,pos blocks + out blocks
    per_tile = (nhead * tq * S * (f4 + bf)                # scores f32 + probs bf16
                + nhead * tq * hd * f4                    # ctx
                + 6 * tq * D * f4                         # attn / residuals / norms
                + tq * dff * (f4 + bf)                    # ffn hidden
                + 3 * S * D * f4)                         # qi==0 projection temps
    est = int((2 * weights + scratch + io + per_tile) * 1.3)
    try:
        phys = pltpu.get_tpu_info().vmem_capacity_bytes
    except Exception:
        phys = 64 * 1024 * 1024                           # conservative (v7x) fallback
    cap = int(phys * 3 // 4)                              # headroom for Mosaic scratch
    return int(min(max(est, 32 * 1024 * 1024), cap))


@functools.lru_cache(maxsize=None)
def _supports_buffered1():
    """Probe pipeline_mode=pl.Buffered(1) with a tiny standalone pallas_call.

    Only this probe catches exceptions; the real kernel compiles without any
    try/except so genuine errors propagate (addresses prior review concern).
    """
    if not hasattr(pl, "Buffered"):
        return False

    def _copy(x_ref, o_ref):
        o_ref[...] = x_ref[...]

    try:
        spec = pl.BlockSpec((8, 128), lambda i: (0, 0),
                            pipeline_mode=pl.Buffered(1))
        f = pl.pallas_call(
            _copy,
            out_shape=jax.ShapeDtypeStruct((8, 128), jnp.float32),
            grid=(1,),
            in_specs=[spec],
            out_specs=pl.BlockSpec((8, 128), lambda i: (0, 0)))
        jax.block_until_ready(f(jnp.zeros((8, 128), jnp.float32)))
        return True
    except Exception:
        return False


# ---------------------------------------------------------------------------
# Public wrappers
# ---------------------------------------------------------------------------
def transformer_encoder_layer_bsd(src_bsd, pos_bsd, kparams, *, nhead, tq=None):
    """Batch-major entry point: src/pos are (B, S, D) f32; returns (B, S, D)."""
    B, S, D = src_bsd.shape
    hd = D // nhead
    dff = kparams["w1"].shape[1]
    tq = _choose_tq(S, tq)
    nq = S // tq

    kernel = functools.partial(_encoder_kernel, nhead, hd, D, tq)

    full_seq = pl.BlockSpec((1, S, D), lambda b, qi: (b, 0, 0))   # invariant over qi
    out_spec = pl.BlockSpec((1, tq, D), lambda b, qi: (b, qi, 0))

    use_buf1 = _supports_buffered1()

    def wspec(shape):
        # grid-invariant weights: single-buffer when the build supports it
        if use_buf1:
            return pl.BlockSpec(shape, lambda b, qi: (0, 0),
                                pipeline_mode=pl.Buffered(1))
        return pl.BlockSpec(shape, lambda b, qi: (0, 0))

    in_specs = [
        full_seq, full_seq,                          # src, pos (whole sequence)
        wspec((D, 2 * D)), wspec((1, 2 * D)),        # fused wq|wk (q pre-scaled), bq|bk
        wspec((D, D)), wspec((1, D)),                # wv, bv
        wspec((D, D)), wspec((1, D)),                # wo (flat), bo
        wspec((D, dff)), wspec((1, dff)),            # w1, b1
        wspec((dff, D)), wspec((1, D)),              # w2, b2
        wspec((1, D)), wspec((1, D)),                # gamma1, beta1
        wspec((1, D)), wspec((1, D)),                # gamma2, beta2
    ]

    return pl.pallas_call(
        kernel,
        out_shape=jax.ShapeDtypeStruct((B, S, D), jnp.float32),
        grid_spec=pltpu.PrefetchScalarGridSpec(
            num_scalar_prefetch=0,
            grid=(B, nq),
            in_specs=in_specs,
            out_specs=out_spec,
            scratch_shapes=[pltpu.VMEM((nhead, S, hd), jnp.bfloat16)] * 3),
        compiler_params=pltpu.CompilerParams(
            dimension_semantics=("parallel", "arbitrary"),
            vmem_limit_bytes=_vmem_limit_bytes(S, D, dff, nhead, tq)),
    )(src_bsd, pos_bsd,
      kparams["wqk"], kparams["bqk"], kparams["wv"], kparams["bv"],
      kparams["wo"], kparams["bo"],
      kparams["w1"], kparams["b1"], kparams["w2"], kparams["b2"],
      kparams["gamma1"], kparams["beta1"], kparams["gamma2"], kparams["beta2"])


def transformer_encoder_layer(src_sbd, pos_sbd, kparams, *, nhead, tq=None):
    """PyTorch-layout interface: (S, B, D) in / out, matching nn.MultiheadAttention.

    # TODO(synk): production callers should keep activations in (B, S, D) and use
    # transformer_encoder_layer_bsd directly to avoid these HBM transposes.
    """
    src = jnp.transpose(src_sbd, (1, 0, 2))
    pos = jnp.transpose(pos_sbd, (1, 0, 2))
    out = transformer_encoder_layer_bsd(src, pos, kparams, nhead=nhead, tq=tq)
    return jnp.transpose(out, (1, 0, 2))


# ---------------------------------------------------------------------------
# Parameter handling + pure-JAX reference (mirrors PyTorch, eval mode).
# ---------------------------------------------------------------------------
def init_params(key, d_model, nhead, dim_feedforward):
    ks = jax.random.split(key, 8)
    s = 0.02
    in_proj_w = jax.random.normal(ks[0], (3 * d_model, d_model), jnp.float32) * s
    in_proj_b = jax.random.normal(ks[1], (1, 3 * d_model), jnp.float32) * s
    wo = jax.random.normal(ks[2], (d_model, d_model), jnp.float32) * s
    bo = jax.random.normal(ks[3], (1, d_model), jnp.float32) * s
    w1 = jax.random.normal(ks[4], (dim_feedforward, d_model), jnp.float32) * s
    b1 = jax.random.normal(ks[5], (1, dim_feedforward), jnp.float32) * s
    w2 = jax.random.normal(ks[6], (d_model, dim_feedforward), jnp.float32) * s
    b2 = jax.random.normal(ks[7], (1, d_model), jnp.float32) * s
    D = d_model
    return {
        "wq_t": in_proj_w[:D].T, "bq": in_proj_b[:, :D],
        "wk_t": in_proj_w[D:2 * D].T, "bk": in_proj_b[:, D:2 * D],
        "wv_t": in_proj_w[2 * D:].T, "bv": in_proj_b[:, 2 * D:],
        "wo_t": wo.T, "bo": bo,
        "w1_t": w1.T, "b1": b1,
        "w2_t": w2.T, "b2": b2,
        "gamma1": jnp.ones((1, D), jnp.float32), "beta1": jnp.zeros((1, D), jnp.float32),
        "gamma2": jnp.ones((1, D), jnp.float32), "beta2": jnp.zeros((1, D), jnp.float32),
    }


def prepare_kernel_params(params, *, nhead):
    """Fuse/arrange weights for the kernel: concat Q|K (q columns pre-scaled by
    1/sqrt(head_dim)), keep wo flat, cast matrices to bf16 (biases stay f32)."""
    D = params["wq_t"].shape[0]
    hd = D // nhead
    scale = 1.0 / math.sqrt(hd)
    bf16 = jnp.bfloat16
    return {
        "wqk": jnp.concatenate([params["wq_t"] * scale, params["wk_t"]],
                               axis=1).astype(bf16),
        "bqk": jnp.concatenate([params["bq"] * scale, params["bk"]], axis=1),
        "wv": params["wv_t"].astype(bf16), "bv": params["bv"],
        "wo": params["wo_t"].astype(bf16), "bo": params["bo"],
        "w1": params["w1_t"].astype(bf16), "b1": params["b1"],
        "w2": params["w2_t"].astype(bf16), "b2": params["b2"],
        "gamma1": params["gamma1"], "beta1": params["beta1"],
        "gamma2": params["gamma2"], "beta2": params["beta2"],
    }


def reference(src_sbd, pos_sbd, params, *, nhead):
    S, B, D = src_sbd.shape
    hd = D // nhead
    x = jnp.transpose(src_sbd, (1, 0, 2))
    p = jnp.transpose(pos_sbd, (1, 0, 2))
    qk = x + p
    q = qk @ params["wq_t"] + params["bq"]
    k = qk @ params["wk_t"] + params["bk"]
    v = x @ params["wv_t"] + params["bv"]
    q = q.reshape(B, S, nhead, hd).transpose(0, 2, 1, 3) / math.sqrt(hd)
    k = k.reshape(B, S, nhead, hd).transpose(0, 2, 1, 3)
    v = v.reshape(B, S, nhead, hd).transpose(0, 2, 1, 3)
    sc = jnp.einsum("bhqd,bhkd->bhqk", q, k)
    pr = jax.nn.softmax(sc, axis=-1)
    a = jnp.einsum("bhqk,bhkd->bhqd", pr, v).transpose(0, 2, 1, 3).reshape(B, S, D)
    a = a @ params["wo_t"] + params["bo"]
    x1 = _layer_norm(x + a, params["gamma1"], params["beta1"])
    h = jnp.maximum(x1 @ params["w1_t"] + params["b1"], 0.0)
    h = h @ params["w2_t"] + params["b2"]
    x2 = _layer_norm(x1 + h, params["gamma2"], params["beta2"])
    return jnp.transpose(x2, (1, 0, 2))


if __name__ == "__main__":
    # Small correctness shapes (perf tuning should use D/dff multiples of 128
    # and S up to 1024; these toy shapes only validate the kernel end-to-end).
    S, B, D = 16, 2, 128
    NHEAD, DFF = 4, 256
    TQ = 8          # forces 2 q-tiles so the flash-style tiling path is exercised

    key = jax.random.PRNGKey(0)
    k_src, k_pos, k_par = jax.random.split(key, 3)
    src = jax.random.normal(k_src, (S, B, D), jnp.float32)
    pos = jax.random.normal(k_pos, (S, B, D), jnp.float32)
    params = init_params(k_par, D, NHEAD, DFF)
    kparams = prepare_kernel_params(params, nhead=NHEAD)

    out = transformer_encoder_layer(src, pos, kparams, nhead=NHEAD, tq=TQ)
    out = jax.block_until_ready(out)

    ref = reference(src, pos, params, nhead=NHEAD)
    assert out.shape == (S, B, D)
    err = float(jnp.max(jnp.abs(out - ref)))
    # tolerance relaxed vs. f32 reference: matmul operands are bf16 and the
    # softmax denominator uses the approximate EUP reciprocal
    assert jnp.allclose(out, ref, atol=3e-2, rtol=3e-2), \
        f"mismatch vs reference (max abs err {err})"
    print("KERNEL_OK")
</pallas_src>

<mosaic_0001>
module attributes {stable_mosaic.version = 11 : i64} {
  func.func @_copy(%arg0: i32, %arg1: memref<8x128xf32, #tpu.memory_space<vmem>>, %arg2: memref<8x128xf32, #tpu.memory_space<vmem>>) attributes {dimension_semantics = [#tpu.dimension_semantics<arbitrary>], iteration_bounds = array<i64: 1>, scalar_prefetch = 0 : i64, scratch_operands = 0 : i64, tpu.core_type = #tpu.core_type<tc>, window_params = [{pipeline_mode = #tpu.pipeline_mode<synchronous>, transform_indices = @transform_0, window_bounds = array<i64: 8, 128>}, {pipeline_mode = #tpu.pipeline_mode<synchronous>, transform_indices = @transform_1, window_bounds = array<i64: 8, 128>}]} {
    %c0 = arith.constant 0 : index
    %c0_0 = arith.constant 0 : index
    %0 = vector.load %arg1[%c0, %c0_0] : memref<8x128xf32, #tpu.memory_space<vmem>>, vector<8x128xf32>
    %c0_1 = arith.constant 0 : index
    %c0_2 = arith.constant 0 : index
    %1 = vector.load %arg2[%c0_1, %c0_2] : memref<8x128xf32, #tpu.memory_space<vmem>>, vector<8x128xf32>
    tpu.vector_store %arg2[%c0_1, %c0_2], %0 {strides = array<i32>} : memref<8x128xf32, #tpu.memory_space<vmem>>, vector<8x128xf32>,
    return
  }
  func.func @transform_0(%arg0: i32) -> (i32, i32) {
    %c0_i32 = arith.constant 0 : i32
    %c0_i32_0 = arith.constant 0 : i32
    %c0_i32_1 = arith.constant 0 : i32
    return %c0_i32, %c0_i32_0 : i32, i32
  }
  func.func @transform_1(%arg0: i32) -> (i32, i32) {
    %c0_i32 = arith.constant 0 : i32
    %c0_i32_0 = arith.constant 0 : i32
    %c0_i32_1 = arith.constant 0 : i32
    return %c0_i32, %c0_i32_0 : i32, i32
  }
}

module attributes {stable_mosaic.version = 11 : i64} {
  func.func @_encoder_kernel(%arg0: i32, %arg1: i32, %arg2: memref<1x16x128xf32, #tpu.memory_space<vmem>>, %arg3: memref<1x16x128xf32, #tpu.memory_space<vmem>>, %arg4: memref<128x256xbf16, #tpu.memory_space<vmem>>, %arg5: memref<1x256xf32, #tpu.memory_space<vmem>>, %arg6: memref<128x128xbf16, #tpu.memory_space<vmem>>, %arg7: memref<1x128xf32, #tpu.memory_space<vmem>>, %arg8: memref<128x128xbf16, #tpu.memory_space<vmem>>, %arg9: memref<1x128xf32, #tpu.memory_space<vmem>>, %arg10: memref<128x256xbf16, #tpu.memory_space<vmem>>, %arg11: memref<1x256xf32, #tpu.memory_space<vmem>>, %arg12: memref<256x128xbf16, #tpu.memory_space<vmem>>, %arg13: memref<1x128xf32, #tpu.memory_space<vmem>>, %arg14: memref<1x128xf32, #tpu.memory_space<vmem>>, %arg15: memref<1x128xf32, #tpu.memory_space<vmem>>, %arg16: memref<1x128xf32, #tpu.memory_space<vmem>>, %arg17: memref<1x128xf32, #tpu.memory_space<vmem>>, %arg18: memref<1x8x128xf32, #tpu.memory_space<vmem>>, %arg19: memref<4x16x32xbf16, #tpu.memory_space<vmem>>, %arg20: memref<4x16x32xbf16, #tpu.memory_space<vmem>>, %arg21: memref<4x16x32xbf16, #tpu.memory_space<vmem>>) attributes {dimension_semantics = [#tpu.dimension_semantics<parallel>, #tpu.dimension_semantics<arbitrary>], iteration_bounds = array<i64: 2, 2>, scalar_prefetch = 0 : i64, scratch_operands = 3 : i64, tpu.core_type = #tpu.core_type<tc>, window_params = [{transform_indices = @transform_0, window_bounds = array<i64: 1, 16, 128>}, {transform_indices = @transform_1, window_bounds = array<i64: 1, 16, 128>}, {pipeline_mode = #tpu.pipeline_mode<synchronous>, transform_indices = @transform_2, window_bounds = array<i64: 128, 256>}, {pipeline_mode = #tpu.pipeline_mode<synchronous>, transform_indices = @transform_3, window_bounds = array<i64: 1, 256>}, {pipeline_mode = #tpu.pipeline_mode<synchronous>, transform_indices = @transform_4, window_bounds = array<i64: 128, 128>}, {pipeline_mode = #tpu.pipeline_mode<synchronous>, transform_indices = @transform_5, window_bounds = array<i64: 1, 128>}, {pipeline_mode = #tpu.pipeline_mode<synchronous>, transform_indices = @transform_6, window_bounds = array<i64: 128, 128>}, {pipeline_mode = #tpu.pipeline_mode<synchronous>, transform_indices = @transform_7, window_bounds = array<i64: 1, 128>}, {pipeline_mode = #tpu.pipeline_mode<synchronous>, transform_indices = @transform_8, window_bounds = array<i64: 128, 256>}, {pipeline_mode = #tpu.pipeline_mode<synchronous>, transform_indices = @transform_9, window_bounds = array<i64: 1, 256>}, {pipeline_mode = #tpu.pipeline_mode<synchronous>, transform_indices = @transform_10, window_bounds = array<i64: 256, 128>}, {pipeline_mode = #tpu.pipeline_mode<synchronous>, transform_indices = @transform_11, window_bounds = array<i64: 1, 128>}, {pipeline_mode = #tpu.pipeline_mode<synchronous>, transform_indices = @transform_12, window_bounds = array<i64: 1, 128>}, {pipeline_mode = #tpu.pipeline_mode<synchronous>, transform_indices = @transform_13, window_bounds = array<i64: 1, 128>}, {pipeline_mode = #tpu.pipeline_mode<synchronous>, transform_indices = @transform_14, window_bounds = array<i64: 1, 128>}, {pipeline_mode = #tpu.pipeline_mode<synchronous>, transform_indices = @transform_15, window_bounds = array<i64: 1, 128>}, {transform_indices = @transform_16, window_bounds = array<i64: 1, 8, 128>}]} {
    %c0_i32 = arith.constant 0 : i32
    %0 = arith.cmpi eq, %arg1, %c0_i32 : i32
    %1 = arith.extui %0 : i1 to i32
    %c0_i32_0 = arith.constant 0 : i32
    %2 = arith.cmpi ne, %1, %c0_i32_0 : i32
    scf.if %2 {
      %c0_50 = arith.constant 0 : index
      %c0_51 = arith.constant 0 : index
      %c0_52 = arith.constant 0 : index
      %110 = vector.load %arg2[%c0_50, %c0_51, %c0_52] : memref<1x16x128xf32, #tpu.memory_space<vmem>>, vector<1x16x128xf32>
      %111 = vector.shape_cast %110 : vector<1x16x128xf32> to vector<16x128xf32>
      %c0_53 = arith.constant 0 : index
      %c0_54 = arith.constant 0 : index
      %c0_55 = arith.constant 0 : index
      %112 = vector.load %arg3[%c0_53, %c0_54, %c0_55] : memref<1x16x128xf32, #tpu.memory_space<vmem>>, vector<1x16x128xf32>
      %113 = vector.shape_cast %112 : vector<1x16x128xf32> to vector<16x128xf32>
      %114 = arith.addf %111, %113 : vector<16x128xf32>
      %115 = arith.truncf %114 : vector<16x128xf32> to vector<16x128xbf16>
      %c0_56 = arith.constant 0 : index
      %c0_57 = arith.constant 0 : index
      %116 = vector.load %arg4[%c0_56, %c0_57] : memref<128x256xbf16, #tpu.memory_space<vmem>>, vector<128x256xbf16>
      %cst_58 = arith.constant dense<0.000000e+00> : vector<16x256xf32>
      %117 = tpu.matmul %115, %116, %cst_58 {dimension_numbers = #tpu.dot_dimension_numbers<[1], [0], [0], [1], [0, 0, 1, 1], [], []>} : vector<16x128xbf16>, vector<128x256xbf16>, vector<16x256xf32> -> vector<16x256xf32>
      %c0_59 = arith.constant 0 : index
      %c0_60 = arith.constant 0 : index
      %118 = vector.load %arg5[%c0_59, %c0_60] : memref<1x256xf32, #tpu.memory_space<vmem>>, vector<1x256xf32>
      %119 = vector.broadcast %118 : vector<1x256xf32> to vector<16x256xf32>
      %120 = arith.addf %117, %119 : vector<16x256xf32>
      %121 = arith.truncf %111 : vector<16x128xf32> to vector<16x128xbf16>
      %c0_61 = arith.constant 0 : index
      %c0_62 = arith.constant 0 : index
      %122 = vector.load %arg6[%c0_61, %c0_62] : memref<128x128xbf16, #tpu.memory_space<vmem>>, vector<128x128xbf16>
      %cst_63 = arith.constant dense<0.000000e+00> : vector<16x128xf32>
      %123 = tpu.matmul %121, %122, %cst_63 {dimension_numbers = #tpu.dot_dimension_numbers<[1], [0], [0], [1], [0, 0, 1, 1], [], []>} : vector<16x128xbf16>, vector<128x128xbf16>, vector<16x128xf32> -> vector<16x128xf32>
      %c0_64 = arith.constant 0 : index
      %c0_65 = arith.constant 0 : index
      %124 = vector.load %arg7[%c0_64, %c0_65] : memref<1x128xf32, #tpu.memory_space<vmem>>, vector<1x128xf32>
      %125 = vector.broadcast %124 : vector<1x128xf32> to vector<16x128xf32>
      %126 = arith.addf %123, %125 : vector<16x128xf32>
      %127 = vector.extract_strided_slice %120 {offsets = [0, 0], sizes = [16, 128], strides = [1, 1]} : vector<16x256xf32> to vector<16x128xf32>
      %128 = arith.truncf %127 : vector<16x128xf32> to vector<16x128xbf16>
      %129 = vector.extract_strided_slice %128 {offsets = [0, 0], sizes = [16, 32], strides = [1, 1]} : vector<16x128xbf16> to vector<16x32xbf16>
      %130 = vector.extract_strided_slice %128 {offsets = [0, 32], sizes = [16, 32], strides = [1, 1]} : vector<16x128xbf16> to vector<16x32xbf16>
      %131 = vector.extract_strided_slice %128 {offsets = [0, 64], sizes = [16, 32], strides = [1, 1]} : vector<16x128xbf16> to vector<16x32xbf16>
      %132 = vector.extract_strided_slice %128 {offsets = [0, 96], sizes = [16, 32], strides = [1, 1]} : vector<16x128xbf16> to vector<16x32xbf16>
      %133 = vector.shape_cast %129 : vector<16x32xbf16> to vector<1x16x32xbf16>
      %134 = vector.shape_cast %130 : vector<16x32xbf16> to vector<1x16x32xbf16>
      %135 = vector.shape_cast %131 : vector<16x32xbf16> to vector<1x16x32xbf16>
      %136 = vector.shape_cast %132 : vector<16x32xbf16> to vector<1x16x32xbf16>
      %137 = tpu.concatenate %133, %134, %135, %136 in 0 : vector<1x16x32xbf16>, vector<1x16x32xbf16>, vector<1x16x32xbf16>, vector<1x16x32xbf16> -> vector<4x16x32xbf16>
      %c0_66 = arith.constant 0 : index
      %c0_67 = arith.constant 0 : index
      %c0_68 = arith.constant 0 : index
      %138 = vector.load %arg19[%c0_66, %c0_67, %c0_68] : memref<4x16x32xbf16, #tpu.memory_space<vmem>>, vector<4x16x32xbf16>
      tpu.vector_store %arg19[%c0_66, %c0_67, %c0_68], %137 {strides = array<i32>} : memref<4x16x32xbf16, #tpu.memory_space<vmem>>, vector<4x16x32xbf16>,
      %139 = vector.extract_strided_slice %120 {offsets = [0, 128], sizes = [16, 128], strides = [1, 1]} : vector<16x256xf32> to vector<16x128xf32>
      %140 = arith.truncf %139 : vector<16x128xf32> to vector<16x128xbf16>
      %141 = vector.extract_strided_slice %140 {offsets = [0, 0], sizes = [16, 32], strides = [1, 1]} : vector<16x128xbf16> to vector<16x32xbf16>
      %142 = vector.extract_strided_slice %140 {offsets = [0, 32], sizes = [16, 32], strides = [1, 1]} : vector<16x128xbf16> to vector<16x32xbf16>
      %143 = vector.extract_strided_slice %140 {offsets = [0, 64], sizes = [16, 32], strides = [1, 1]} : vector<16x128xbf16> to vector<16x32xbf16>
      %144 = vector.extract_strided_slice %140 {offsets = [0, 96], sizes = [16, 32], strides = [1, 1]} : vector<16x128xbf16> to vector<16x32xbf16>
      %145 = vector.shape_cast %141 : vector<16x32xbf16> to vector<1x16x32xbf16>
      %146 = vector.shape_cast %142 : vector<16x32xbf16> to vector<1x16x32xbf16>
      %147 = vector.shape_cast %143 : vector<16x32xbf16> to vector<1x16x32xbf16>
      %148 = vector.shape_cast %144 : vector<16x32xbf16> to vector<1x16x32xbf16>
      %149 = tpu.concatenate %145, %146, %147, %148 in 0 : vector<1x16x32xbf16>, vector<1x16x32xbf16>, vector<1x16x32xbf16>, vector<1x16x32xbf16> -> vector<4x16x32xbf16>
      %c0_69 = arith.constant 0 : index
      %c0_70 = arith.constant 0 : index
      %c0_71 = arith.constant 0 : index
      %150 = vector.load %arg20[%c0_69, %c0_70, %c0_71] : memref<4x16x32xbf16, #tpu.memory_space<vmem>>, vector<4x16x32xbf16>
      tpu.vector_store %arg20[%c0_69, %c0_70, %c0_71], %149 {strides = array<i32>} : memref<4x16x32xbf16, #tpu.memory_space<vmem>>, vector<4x16x32xbf16>,
      %151 = arith.truncf %126 : vector<16x128xf32> to vector<16x128xbf16>
      %152 = vector.extract_strided_slice %151 {offsets = [0, 0], sizes = [16, 32], strides = [1, 1]} : vector<16x128xbf16> to vector<16x32xbf16>
      %153 = vector.extract_strided_slice %151 {offsets = [0, 32], sizes = [16, 32], strides = [1, 1]} : vector<16x128xbf16> to vector<16x32xbf16>
      %154 = vector.extract_strided_slice %151 {offsets = [0, 64], sizes = [16, 32], strides = [1, 1]} : vector<16x128xbf16> to vector<16x32xbf16>
      %155 = vector.extract_strided_slice %151 {offsets = [0, 96], sizes = [16, 32], strides = [1, 1]} : vector<16x128xbf16> to vector<16x32xbf16>
      %156 = vector.shape_cast %152 : vector<16x32xbf16> to vector<1x16x32xbf16>
      %157 = vector.shape_cast %153 : vector<16x32xbf16> to vector<1x16x32xbf16>
      %158 = vector.shape_cast %154 : vector<16x32xbf16> to vector<1x16x32xbf16>
      %159 = vector.shape_cast %155 : vector<16x32xbf16> to vector<1x16x32xbf16>
      %160 = tpu.concatenate %156, %157, %158, %159 in 0 : vector<1x16x32xbf16>, vector<1x16x32xbf16>, vector<1x16x32xbf16>, vector<1x16x32xbf16> -> vector<4x16x32xbf16>
      %c0_72 = arith.constant 0 : index
      %c0_73 = arith.constant 0 : index
      %c0_74 = arith.constant 0 : index
      %161 = vector.load %arg21[%c0_72, %c0_73, %c0_74] : memref<4x16x32xbf16, #tpu.memory_space<vmem>>, vector<4x16x32xbf16>
      tpu.vector_store %arg21[%c0_72, %c0_73, %c0_74], %160 {strides = array<i32>} : memref<4x16x32xbf16, #tpu.memory_space<vmem>>, vector<4x16x32xbf16>,
    } else {
    }
    %c8_i32 = arith.constant 8 : i32
    %3 = arith.muli %arg1, %c8_i32 : i32
    %4 = tpu.assume_multiple %3, 8 : i32
    %c0 = arith.constant 0 : index
    %5 = arith.index_cast %4 : i32 to index
    %c0_1 = arith.constant 0 : index
    %6 = vector.load %arg2[%c0, %5, %c0_1] : memref<1x16x128xf32, #tpu.memory_space<vmem>>, vector<1x8x128xf32>
    %7 = vector.shape_cast %6 : vector<1x8x128xf32> to vector<8x128xf32>
    %c0_2 = arith.constant 0 : index
    %8 = arith.index_cast %4 : i32 to index
    %c0_3 = arith.constant 0 : index
    %9 = vector.load %arg19[%c0_2, %8, %c0_3] : memref<4x16x32xbf16, #tpu.memory_space<vmem>>, vector<4x8x32xbf16>
    %c0_4 = arith.constant 0 : index
    %c0_5 = arith.constant 0 : index
    %c0_6 = arith.constant 0 : index
    %10 = vector.load %arg20[%c0_4, %c0_5, %c0_6] : memref<4x16x32xbf16, #tpu.memory_space<vmem>>, vector<4x16x32xbf16>
    "tpu.trace_start"() <{level = 10 : i32, message = "hqe,hke->hqk"}> : () -> ()
    %cst = arith.constant dense<0.000000e+00> : vector<4x8x16xf32>
    %11 = tpu.matmul %9, %10, %cst {dimension_numbers = #tpu.dot_dimension_numbers<[2], [2], [1], [1], [0, 0, 0, 1, 1, 1], [0], [0]>} : vector<4x8x32xbf16>, vector<4x16x32xbf16>, vector<4x8x16xf32> -> vector<4x8x16xf32>
    "tpu.trace_stop"() : () -> ()
    %cst_7 = arith.constant dense<0xFF800000> : vector<4x8xf32>
    %12 = vector.multi_reduction <maximumf>, %11, %cst_7 [2] : vector<4x8x16xf32> to vector<4x8xf32>
    %13 = vector.shape_cast %12 : vector<4x8xf32> to vector<4x8x1xf32>
    %14 = vector.broadcast %13 : vector<4x8x1xf32> to vector<4x8x16xf32>
    %15 = arith.subf %11, %14 : vector<4x8x16xf32>
    %16 = math.exp %15 : vector<4x8x16xf32>
    %cst_8 = arith.constant dense<0.000000e+00> : vector<4x8xf32>
    %17 = vector.multi_reduction <add>, %16, %cst_8 [2] : vector<4x8x16xf32> to vector<4x8xf32>
    %18 = vector.shape_cast %17 : vector<4x8xf32> to vector<4x8x1xf32>
    %19 = tpu.reciprocal %18 {approx = true} : vector<4x8x1xf32> -> vector<4x8x1xf32>
    %20 = vector.broadcast %19 : vector<4x8x1xf32> to vector<4x8x16xf32>
    %21 = arith.mulf %16, %20 : vector<4x8x16xf32>
    %22 = arith.truncf %21 : vector<4x8x16xf32> to vector<4x8x16xbf16>
    %c0_9 = arith.constant 0 : index
    %c0_10 = arith.constant 0 : index
    %c0_11 = arith.constant 0 : index
    %23 = vector.load %arg21[%c0_9, %c0_10, %c0_11] : memref<4x16x32xbf16, #tpu.memory_space<vmem>>, vector<4x16x32xbf16>
    "tpu.trace_start"() <{level = 10 : i32, message = "hqk,hke->hqe"}> : () -> ()
    %cst_12 = arith.constant dense<0.000000e+00> : vector<4x8x32xf32>
    %24 = tpu.matmul %22, %23, %cst_12 {dimension_numbers = #tpu.dot_dimension_numbers<[2], [1], [1], [2], [0, 0, 0, 1, 1, 2], [0], [0]>} : vector<4x8x16xbf16>, vector<4x16x32xbf16>, vector<4x8x32xf32> -> vector<4x8x32xf32>
    "tpu.trace_stop"() : () -> ()
    %25 = vector.extract_strided_slice %24 {offsets = [0, 0, 0], sizes = [1, 8, 32], strides = [1, 1, 1]} : vector<4x8x32xf32> to vector<1x8x32xf32>
    %26 = vector.shape_cast %25 : vector<1x8x32xf32> to vector<8x32xf32>
    %27 = arith.truncf %26 : vector<8x32xf32> to vector<8x32xbf16>
    %28 = vector.extract_strided_slice %24 {offsets = [1, 0, 0], sizes = [1, 8, 32], strides = [1, 1, 1]} : vector<4x8x32xf32> to vector<1x8x32xf32>
    %29 = vector.shape_cast %28 : vector<1x8x32xf32> to vector<8x32xf32>
    %30 = arith.truncf %29 : vector<8x32xf32> to vector<8x32xbf16>
    %31 = vector.extract_strided_slice %24 {offsets = [2, 0, 0], sizes = [1, 8, 32], strides = [1, 1, 1]} : vector<4x8x32xf32> to vector<1x8x32xf32>
    %32 = vector.shape_cast %31 : vector<1x8x32xf32> to vector<8x32xf32>
    %33 = arith.truncf %32 : vector<8x32xf32> to vector<8x32xbf16>
    %34 = vector.extract_strided_slice %24 {offsets = [3, 0, 0], sizes = [1, 8, 32], strides = [1, 1, 1]} : vector<4x8x32xf32> to vector<1x8x32xf32>
    %35 = vector.shape_cast %34 : vector<1x8x32xf32> to vector<8x32xf32>
    %36 = arith.truncf %35 : vector<8x32xf32> to vector<8x32xbf16>
    %37 = tpu.concatenate %27, %30, %33, %36 in 1 : vector<8x32xbf16>, vector<8x32xbf16>, vector<8x32xbf16>, vector<8x32xbf16> -> vector<8x128xbf16>
    %c0_13 = arith.constant 0 : index
    %c0_14 = arith.constant 0 : index
    %38 = vector.load %arg8[%c0_13, %c0_14] : memref<128x128xbf16, #tpu.memory_space<vmem>>, vector<128x128xbf16>
    %cst_15 = arith.constant dense<0.000000e+00> : vector<8x128xf32>
    %39 = tpu.matmul %37, %38, %cst_15 {dimension_numbers = #tpu.dot_dimension_numbers<[1], [0], [0], [1], [0, 0, 1, 1], [], []>} : vector<8x128xbf16>, vector<128x128xbf16>, vector<8x128xf32> -> vector<8x128xf32>
    %c0_16 = arith.constant 0 : index
    %c0_17 = arith.constant 0 : index
    %40 = vector.load %arg9[%c0_16, %c0_17] : memref<1x128xf32, #tpu.memory_space<vmem>>, vector<1x128xf32>
    %41 = vector.broadcast %40 : vector<1x128xf32> to vector<8x128xf32>
    %42 = arith.addf %39, %41 : vector<8x128xf32>
    %43 = arith.addf %7, %42 : vector<8x128xf32>
    %c0_18 = arith.constant 0 : index
    %c0_19 = arith.constant 0 : index
    %44 = vector.load %arg14[%c0_18, %c0_19] : memref<1x128xf32, #tpu.memory_space<vmem>>, vector<1x128xf32>
    %c0_20 = arith.constant 0 : index
    %c0_21 = arith.constant 0 : index
    %45 = vector.load %arg15[%c0_20, %c0_21] : memref<1x128xf32, #tpu.memory_space<vmem>>, vector<1x128xf32>
    %cst_22 = arith.constant dense<0.000000e+00> : vector<8xf32>
    %46 = vector.multi_reduction <add>, %43, %cst_22 [1] : vector<8x128xf32> to vector<8xf32>
    %47 = vector.shape_cast %46 : vector<8xf32> to vector<8x1xf32>
    %cst_23 = arith.constant 1.280000e+02 : f32
    %48 = vector.broadcast %cst_23 : f32 to vector<8x1xf32>
    %49 = arith.divf %47, %48 : vector<8x1xf32>
    %50 = vector.broadcast %49 : vector<8x1xf32> to vector<8x128xf32>
    %51 = arith.subf %43, %50 : vector<8x128xf32>
    %52 = arith.mulf %51, %51 : vector<8x128xf32>
    %cst_24 = arith.constant dense<0.000000e+00> : vector<8xf32>
    %53 = vector.multi_reduction <add>, %52, %cst_24 [1] : vector<8x128xf32> to vector<8xf32>
    %54 = vector.shape_cast %53 : vector<8xf32> to vector<8x1xf32>
    %cst_25 = arith.constant 1.280000e+02 : f32
    %55 = vector.broadcast %cst_25 : f32 to vector<8x1xf32>
    %56 = arith.divf %54, %55 : vector<8x1xf32>
    %57 = vector.broadcast %49 : vector<8x1xf32> to vector<8x128xf32>
    %58 = arith.subf %43, %57 : vector<8x128xf32>
    %cst_26 = arith.constant 9.99999974E-6 : f32
    %59 = vector.broadcast %cst_26 : f32 to vector<8x1xf32>
    %60 = arith.addf %56, %59 : vector<8x1xf32>
    %61 = math.rsqrt %60 : vector<8x1xf32>
    %62 = vector.broadcast %61 : vector<8x1xf32> to vector<8x128xf32>
    %63 = arith.mulf %58, %62 : vector<8x128xf32>
    %64 = vector.broadcast %44 : vector<1x128xf32> to vector<8x128xf32>
    %65 = arith.mulf %63, %64 : vector<8x128xf32>
    %66 = vector.broadcast %45 : vector<1x128xf32> to vector<8x128xf32>
    %67 = arith.addf %65, %66 : vector<8x128xf32>
    %68 = arith.truncf %67 : vector<8x128xf32> to vector<8x128xbf16>
    %c0_27 = arith.constant 0 : index
    %c0_28 = arith.constant 0 : index
    %69 = vector.load %arg10[%c0_27, %c0_28] : memref<128x256xbf16, #tpu.memory_space<vmem>>, vector<128x256xbf16>
    %cst_29 = arith.constant dense<0.000000e+00> : vector<8x256xf32>
    %70 = tpu.matmul %68, %69, %cst_29 {dimension_numbers = #tpu.dot_dimension_numbers<[1], [0], [0], [1], [0, 0, 1, 1], [], []>} : vector<8x128xbf16>, vector<128x256xbf16>, vector<8x256xf32> -> vector<8x256xf32>
    %c0_30 = arith.constant 0 : index
    %c0_31 = arith.constant 0 : index
    %71 = vector.load %arg11[%c0_30, %c0_31] : memref<1x256xf32, #tpu.memory_space<vmem>>, vector<1x256xf32>
    %72 = vector.broadcast %71 : vector<1x256xf32> to vector<8x256xf32>
    %73 = arith.addf %70, %72 : vector<8x256xf32>
    %cst_32 = arith.constant 0.000000e+00 : f32
    %74 = vector.broadcast %cst_32 : f32 to vector<8x256xf32>
    %75 = arith.maximumf %73, %74 : vector<8x256xf32>
    %76 = arith.truncf %75 : vector<8x256xf32> to vector<8x256xbf16>
    %c0_33 = arith.constant 0 : index
    %c0_34 = arith.constant 0 : index
    %77 = vector.load %arg12[%c0_33, %c0_34] : memref<256x128xbf16, #tpu.memory_space<vmem>>, vector<256x128xbf16>
    %cst_35 = arith.constant dense<0.000000e+00> : vector<8x128xf32>
    %78 = tpu.matmul %76, %77, %cst_35 {dimension_numbers = #tpu.dot_dimension_numbers<[1], [0], [0], [1], [0, 0, 1, 1], [], []>} : vector<8x256xbf16>, vector<256x128xbf16>, vector<8x128xf32> -> vector<8x128xf32>
    %c0_36 = arith.constant 0 : index
    %c0_37 = arith.constant 0 : index
    %79 = vector.load %arg13[%c0_36, %c0_37] : memref<1x128xf32, #tpu.memory_space<vmem>>, vector<1x128xf32>
    %80 = vector.broadcast %79 : vector<1x128xf32> to vector<8x128xf32>
    %81 = arith.addf %78, %80 : vector<8x128xf32>
    %82 = arith.addf %67, %81 : vector<8x128xf32>
    %c0_38 = arith.constant 0 : index
    %c0_39 = arith.constant 0 : index
    %83 = vector.load %arg16[%c0_38, %c0_39] : memref<1x128xf32, #tpu.memory_space<vmem>>, vector<1x128xf32>
    %c0_40 = arith.constant 0 : index
    %c0_41 = arith.constant 0 : index
    %84 = vector.load %arg17[%c0_40, %c0_41] : memref<1x128xf32, #tpu.memory_space<vmem>>, vector<1x128xf32>
    %cst_42 = arith.constant dense<0.000000e+00> : vector<8xf32>
    %85 = vector.multi_reduction <add>, %82, %cst_42 [1] : vector<8x128xf32> to vector<8xf32>
    %86 = vector.shape_cast %85 : vector<8xf32> to vector<8x1xf32>
    %cst_43 = arith.constant 1.280000e+02 : f32
    %87 = vector.broadcast %cst_43 : f32 to vector<8x1xf32>
    %88 = arith.divf %86, %87 : vector<8x1xf32>
    %89 = vector.broadcast %88 : vector<8x1xf32> to vector<8x128xf32>
    %90 = arith.subf %82, %89 : vector<8x128xf32>
    %91 = arith.mulf %90, %90 : vector<8x128xf32>
    %cst_44 = arith.constant dense<0.000000e+00> : vector<8xf32>
    %92 = vector.multi_reduction <add>, %91, %cst_44 [1] : vector<8x128xf32> to vector<8xf32>
    %93 = vector.shape_cast %92 : vector<8xf32> to vector<8x1xf32>
    %cst_45 = arith.constant 1.280000e+02 : f32
    %94 = vector.broadcast %cst_45 : f32 to vector<8x1xf32>
    %95 = arith.divf %93, %94 : vector<8x1xf32>
    %96 = vector.broadcast %88 : vector<8x1xf32> to vector<8x128xf32>
    %97 = arith.subf %82, %96 : vector<8x128xf32>
    %cst_46 = arith.constant 9.99999974E-6 : f32
    %98 = vector.broadcast %cst_46 : f32 to vector<8x1xf32>
    %99 = arith.addf %95, %98 : vector<8x1xf32>
    %100 = math.rsqrt %99 : vector<8x1xf32>
    %101 = vector.broadcast %100 : vector<8x1xf32> to vector<8x128xf32>
    %102 = arith.mulf %97, %101 : vector<8x128xf32>
    %103 = vector.broadcast %83 : vector<1x128xf32> to vector<8x128xf32>
    %104 = arith.mulf %102, %103 : vector<8x128xf32>
    %105 = vector.broadcast %84 : vector<1x128xf32> to vector<8x128xf32>
    %106 = arith.addf %104, %105 : vector<8x128xf32>
    %c0_47 = arith.constant 0 : index
    %c0_48 = arith.constant 0 : index
    %c0_49 = arith.constant 0 : index
    %107 = vector.load %arg18[%c0_47, %c0_48, %c0_49] : memref<1x8x128xf32, #tpu.memory_space<vmem>>, vector<1x8x128xf32>
    %108 = vector.shape_cast %107 : vector<1x8x128xf32> to vector<8x128xf32>
    %109 = vector.shape_cast %106 : vector<8x128xf32> to vector<1x8x128xf32>
    tpu.vector_store %arg18[%c0_47, %c0_48, %c0_49], %109 {strides = array<i32>} : memref<1x8x128xf32, #tpu.memory_space<vmem>>, vector<1x8x128xf32>,
    return
  }
  func.func @transform_0(%arg0: i32, %arg1: i32) -> (i32, i32, i32) {
    %c0_i32 = arith.constant 0 : i32
    %c0_i32_0 = arith.constant 0 : i32
    %c0_i32_1 = arith.constant 0 : i32
    return %arg0, %c0_i32, %c0_i32_0 : i32, i32, i32
  }
  func.func @transform_1(%arg0: i32, %arg1: i32) -> (i32, i32, i32) {
    %c0_i32 = arith.constant 0 : i32
    %c0_i32_0 = arith.constant 0 : i32
    %c0_i32_1 = arith.constant 0 : i32
    return %arg0, %c0_i32, %c0_i32_0 : i32, i32, i32
  }
  func.func @transform_2(%arg0: i32, %arg1: i32) -> (i32, i32) {
    %c0_i32 = arith.constant 0 : i32
    %c0_i32_0 = arith.constant 0 : i32
    %c0_i32_1 = arith.constant 0 : i32
    return %c0_i32, %c0_i32_0 : i32, i32
  }
  func.func @transform_3(%arg0: i32, %arg1: i32) -> (i32, i32) {
    %c0_i32 = arith.constant 0 : i32
    %c0_i32_0 = arith.constant 0 : i32
    %c0_i32_1 = arith.constant 0 : i32
    return %c0_i32, %c0_i32_0 : i32, i32
  }
  func.func @transform_4(%arg0: i32, %arg1: i32) -> (i32, i32) {
    %c0_i32 = arith.constant 0 : i32
    %c0_i32_0 = arith.constant 0 : i32
    %c0_i32_1 = arith.constant 0 : i32
    return %c0_i32, %c0_i32_0 : i32, i32
  }
  func.func @transform_5(%arg0: i32, %arg1: i32) -> (i32, i32) {
    %c0_i32 = arith.constant 0 : i32
    %c0_i32_0 = arith.constant 0 : i32
    %c0_i32_1 = arith.constant 0 : i32
    return %c0_i32, %c0_i32_0 : i32, i32
  }
  func.func @transform_6(%arg0: i32, %arg1: i32) -> (i32, i32) {
    %c0_i32 = arith.constant 0 : i32
    %c0_i32_0 = arith.constant 0 : i32
    %c0_i32_1 = arith.constant 0 : i32
    return %c0_i32, %c0_i32_0 : i32, i32
  }
  func.func @transform_7(%arg0: i32, %arg1: i32) -> (i32, i32) {
    %c0_i32 = arith.constant 0 : i32
    %c0_i32_0 = arith.constant 0 : i32
    %c0_i32_1 = arith.constant 0 : i32
    return %c0_i32, %c0_i32_0 : i32, i32
  }
  func.func @transform_8(%arg0: i32, %arg1: i32) -> (i32, i32) {
    %c0_i32 = arith.constant 0 : i32
    %c0_i32_0 = arith.constant 0 : i32
    %c0_i32_1 = arith.constant 0 : i32
    return %c0_i32, %c0_i32_0 : i32, i32
  }
  func.func @transform_9(%arg0: i32, %arg1: i32) -> (i32, i32) {
    %c0_i32 = arith.constant 0 : i32
    %c0_i32_0 = arith.constant 0 : i32
    %c0_i32_1 = arith.constant 0 : i32
    return %c0_i32, %c0_i32_0 : i32, i32
  }
  func.func @transform_10(%arg0: i32, %arg1: i32) -> (i32, i32) {
    %c0_i32 = arith.constant 0 : i32
    %c0_i32_0 = arith.constant 0 : i32
    %c0_i32_1 = arith.constant 0 : i32
    return %c0_i32, %c0_i32_0 : i32, i32
  }
  func.func @transform_11(%arg0: i32, %arg1: i32) -> (i32, i32) {
    %c0_i32 = arith.constant 0 : i32
    %c0_i32_0 = arith.constant 0 : i32
    %c0_i32_1 = arith.constant 0 : i32
    return %c0_i32, %c0_i32_0 : i32, i32
  }
  func.func @transform_12(%arg0: i32, %arg1: i32) -> (i32, i32) {
    %c0_i32 = arith.constant 0 : i32
    %c0_i32_0 = arith.constant 0 : i32
    %c0_i32_1 = arith.constant 0 : i32
    return %c0_i32, %c0_i32_0 : i32, i32
  }
  func.func @transform_13(%arg0: i32, %arg1: i32) -> (i32, i32) {
    %c0_i32 = arith.constant 0 : i32
    %c0_i32_0 = arith.constant 0 : i32
    %c0_i32_1 = arith.constant 0 : i32
    return %c0_i32, %c0_i32_0 : i32, i32
  }
  func.func @transform_14(%arg0: i32, %arg1: i32) -> (i32, i32) {
    %c0_i32 = arith.constant 0 : i32
    %c0_i32_0 = arith.constant 0 : i32
    %c0_i32_1 = arith.constant 0 : i32
    return %c0_i32, %c0_i32_0 : i32, i32
  }
  func.func @transform_15(%arg0: i32, %arg1: i32) -> (i32, i32) {
    %c0_i32 = arith.constant 0 : i32
    %c0_i32_0 = arith.constant 0 : i32
    %c0_i32_1 = arith.constant 0 : i32
    return %c0_i32, %c0_i32_0 : i32, i32
  }
  func.func @transform_16(%arg0: i32, %arg1: i32) -> (i32, i32, i32) {
    %c0_i32 = arith.constant 0 : i32
    %c0_i32_0 = arith.constant 0 : i32
    return %arg0, %arg1, %c0_i32 : i32, i32, i32
  }
}

</mosaic_0001>

<llo_original>
// kernel: tpu_custom_call.1
$region0: #{tpu_custom_call.1}
  #allocation0 [shape = 'u32[]', space=smem, size = 0x4, offset = 0x4, fixed_abs, tag = 'smem constant byte address 0x4 - core index']
  #allocation1 [shape = 'u32[144,128]{1,0:T(1,128)}', space=vmem, size = 0x12000, scoped, tag = 'internal scratch']
  %s0 = inlined_call_operand.hbm [shape: f32[8,128], index: 0, kind: input, shape index: {}]
  %s1 = inlined_call_operand.hbm [shape: f32[8,128], index: 1, kind: output, shape index: {}]
  %s2 = sld [smem:[#allocation0]]
  $region18: #{tpu_custom_call.1} parent=0
    _
  %s4 = ssub.s32 1, %s2
  %s5 = scalar_select 0, %s4, %s2
  $region1: #{tpu_custom_call.1} parent=0
    #allocation2 [shape = 'u8[4096]{0}', space=vmem, size = 0x1000, scoped, tag = 'input window, operand 0, single buffered']
    #allocation3 [shape = 's32[1]{0}', space=sflag, size = 0x4, scoped, tag = 'scoped memory for tpu_custom_call.1']
    #allocation4 [shape = 's32[1]{0}', space=sflag, size = 0x4, scoped, tag = 'scoped memory for tpu_custom_call.1']
    #allocation5 [shape = 'u8[4096]{0}', space=vmem, size = 0x1000, scoped, tag = 'output window, operand 0, single buffered']
    %6 = vsyncpa [#allocation3], 0
    %7 = vsyncpa [#allocation4], 0
    // Predicated region
    $region2: #{tpu_custom_call.1} parent=1 // pred_check
      _
    $region3: #{tpu_custom_call.1} parent=1 // pred_check_branch
      %9 = sbr.rel (0) target = $region5
    $region4: #{tpu_custom_call.1} parent=1 // pred_region
      %s11 = ssub.s32 128, 128
      %12 = vsyncadd [#allocation3], %s11
      %s14 = sshll.u32 [#allocation2], 4
      %s15 = int_to_ptr.vmem [resolvable:$true] %s14
      %17 = dma.hbm_to_vmem [thread:$0]  %s0, 128, %s15, [#allocation3]
    $region5: #{tpu_custom_call.1} parent=1 // pred_fallthru
      _
    // Predicated region
    $region6: #{tpu_custom_call.1} parent=1 // pred_check
      _
    $region7: #{tpu_custom_call.1} parent=1 // pred_check_branch
      %19 = sbr.rel (0) target = $region9
    $region8: #{tpu_custom_call.1} parent=1 // pred_region
      %20 = dma.done [#allocation3], 128
    $region9: #{tpu_custom_call.1} parent=1 // pred_fallthru
      _
    %v21 = vld [vmem:[#allocation2] sm:$0xff]
    %22 = vst [vmem:[#allocation5] sm:$0xff] %v21
    // Predicated region
    $region10: #{tpu_custom_call.1} parent=1 // pred_check
      _
    $region11: #{tpu_custom_call.1} parent=1 // pred_check_branch
      %24 = sbr.rel (0) target = $region13
    $region12: #{tpu_custom_call.1} parent=1 // pred_region
      %s26 = ssub.s32 128, 128
      %27 = vsyncadd [#allocation4], %s26
      %s29 = sshll.u32 [#allocation5], 4
      %s30 = int_to_ptr.vmem [resolvable:$true] %s29
      %32 = dma.vmem_to_hbm [thread:$0]  %s30, 128, %s1, [#allocation4]
    $region13: #{tpu_custom_call.1} parent=1 // pred_fallthru
      _
    // Predicated region
    $region14: #{tpu_custom_call.1} parent=1 // pred_check
      _
    $region15: #{tpu_custom_call.1} parent=1 // pred_check_branch
      %34 = sbr.rel (0) target = $region17
    $region16: #{tpu_custom_call.1} parent=1 // pred_region
      %35 = dma.done [#allocation4], 128
    $region17: #{tpu_custom_call.1} parent=1 // pred_fallthru
      _
    %36 = vsyncpa [#allocation3], 1
    %37 = vsyncpa [#allocation4], 1

// kernel: tpu_custom_call.1
$region0: #{tpu_custom_call.1}
  #allocation0 [shape = 'u32[]', space=smem, size = 0x4, offset = 0x4, fixed_abs, tag = 'smem constant byte address 0x4 - core index']
  #allocation1 [shape = 'u32[144,128]{1,0:T(1,128)}', space=vmem, size = 0x12000, scoped, tag = 'internal scratch']
  #allocation2 [shape = 'bf16[4,16,32]{2,1,0:T(8,128)(2,1)}', space=vmem, size = 0x4000, scoped, tag = 'scratch operand']
  #allocation3 [shape = 'bf16[4,16,32]{2,1,0:T(8,128)(2,1)}', space=vmem, size = 0x4000, scoped, tag = 'scratch operand']
  #allocation4 [shape = 'bf16[4,16,32]{2,1,0:T(8,128)(2,1)}', space=vmem, size = 0x4000, scoped, tag = 'scratch operand']
  %s0 = inlined_call_operand.hbm [shape: f32[2,16,128], index: 0, kind: input, shape index: {}]
  %s1 = inlined_call_operand.hbm [shape: f32[2,16,128], index: 1, kind: input, shape index: {}]
  %s2 = inlined_call_operand.hbm [shape: bf16[128,256], index: 2, kind: input, shape index: {}]
  %s3 = inlined_call_operand.vmem [shape: f32[1,256], index: 3, kind: input, shape index: {}]
  %s4 = inlined_call_operand.hbm [shape: bf16[128,128], index: 4, kind: input, shape index: {}]
  %s5 = inlined_call_operand.vmem [shape: f32[1,128], index: 5, kind: input, shape index: {}]
  %s6 = inlined_call_operand.hbm [shape: bf16[128,128], index: 6, kind: input, shape index: {}]
  %s7 = inlined_call_operand.vmem [shape: f32[1,128], index: 7, kind: input, shape index: {}]
  %s8 = inlined_call_operand.hbm [shape: bf16[128,256], index: 8, kind: input, shape index: {}]
  %s9 = inlined_call_operand.vmem [shape: f32[1,256], index: 9, kind: input, shape index: {}]
  %s10 = inlined_call_operand.hbm [shape: bf16[256,128], index: 10, kind: input, shape index: {}]
  %s11 = inlined_call_operand.vmem [shape: f32[1,128], index: 11, kind: input, shape index: {}]
  %s12 = inlined_call_operand.vmem [shape: f32[1,128], index: 12, kind: input, shape index: {}]
  %s13 = inlined_call_operand.vmem [shape: f32[1,128], index: 13, kind: input, shape index: {}]
  %s14 = inlined_call_operand.vmem [shape: f32[1,128], index: 14, kind: input, shape index: {}]
  %s15 = inlined_call_operand.vmem [shape: f32[1,128], index: 15, kind: input, shape index: {}]
  %s16 = inlined_call_operand.hbm [shape: f32[2,16,128], index: 16, kind: output, shape index: {}]
  %s17 = sld [smem:[#allocation0]]
  $region129: #{tpu_custom_call.1} parent=0
    _
  %s19 = ssub.s32 1, %s17
  %s20 = scalar_select 0, %s19, %s17
  $region1: #{tpu_custom_call.1} parent=0
    #allocation5 [shape = 'u8[16384]{0}', space=vmem, size = 0x4000, scoped, tag = 'input window, operand 0']
    #allocation6 [shape = 's32[2]{0}', space=sflag, size = 0x8, scoped, tag = 'scoped memory for tpu_custom_call.1']
    #allocation7 [shape = 's32[2]{0}', space=sflag, size = 0x8, scoped, tag = 'scoped memory for tpu_custom_call.1']
    #allocation8 [shape = 'u8[16384]{0}', space=vmem, size = 0x4000, scoped, tag = 'input window, operand 1']
    #allocation9 [shape = 's32[2]{0}', space=sflag, size = 0x8, scoped, tag = 'scoped memory for tpu_custom_call.1']
    #allocation10 [shape = 'u8[65536]{0}', space=vmem, size = 0x10000, scoped, tag = 'input window, operand 2, single buffered']
    #allocation11 [shape = 'u8[32768]{0}', space=vmem, size = 0x8000, scoped, tag = 'input window, operand 4, single buffered']
    #allocation12 [shape = 's32[1]{0}', space=sflag, size = 0x4, scoped, tag = 'scoped memory for tpu_custom_call.1']
    #allocation13 [shape = 'u8[32768]{0}', space=vmem, size = 0x8000, scoped, tag = 'input window, operand 6, single buffered']
    #allocation14 [shape = 'u8[65536]{0}', space=vmem, size = 0x10000, scoped, tag = 'input window, operand 8, single buffered']
    #allocation15 [shape = 's32[1]{0}', space=sflag, size = 0x4, scoped, tag = 'scoped memory for tpu_custom_call.1']
    #allocation16 [shape = 'u8[65536]{0}', space=vmem, size = 0x10000, scoped, tag = 'input window, operand 10, single buffered']
    #allocation17 [shape = 'u8[8192]{0}', space=vmem, size = 0x2000, scoped, tag = 'output window, operand 0']
    %21 = vsyncpa [#allocation6], 0
    %s22 = scalar_lea.sflag [#allocation6], 1
    %23 = vsyncpa %s22, 0
    %24 = vsyncpa [#allocation9], 0
    %s25 = scalar_lea.sflag [#allocation9], 1
    %26 = vsyncpa %s25, 0
    %27 = vsyncpa [#allocation12], 0
    %28 = vsyncpa [#allocation15], 0
    %29 = vsyncpa [#allocation7], 0
    %s30 = scalar_lea.sflag [#allocation7], 1
    %31 = vsyncpa %s30, 0
    loop: start=0, step=1, limit=6
    $region2: #{tpu_custom_call.1} parent=1 // loop_pre_header
      _
    $region3: #{tpu_custom_call.1} parent=1 // loop_header
      %s33 = sphi 0, %s37
      %p34 = scmp.ge.s32.totalorder %s33, 6
      %s40 = sphi 0, %s52
      %s41 = sphi 0, %s48
      %s42 = sphi 0, %s40
      %s43 = sphi 0, %s41
      %s44 = sphi 0, %s42
      %s45 = sphi 0, %s43
      %s55 = sphi 0, %s57
      %s58 = sphi 0, %s55
      %s59 = sphi 0, %s58
      %s75 = sphi 0, %s59
      %s81 = sphi 0, %s83
      %s84 = sphi 0, %s81
      %s85 = sphi 0, %s84
      %s101 = sphi 0, %s85
      %s105 = sphi 0, %s105
      %s107 = sphi 0, %s105
      %s108 = sphi 0, %s107
      %s122 = sphi 0, %s108
      %s126 = sphi 0, %s126
      %s128 = sphi 0, %s126
      %s129 = sphi 0, %s128
      %s143 = sphi 0, %s129
      %s147 = sphi 0, %s147
      %s149 = sphi 0, %s147
      %s150 = sphi 0, %s149
      %s164 = sphi 0, %s150
      %s168 = sphi 0, %s168
      %s170 = sphi 0, %s168
      %s171 = sphi 0, %s170
      %s185 = sphi 0, %s171
      %s189 = sphi 0, %s189
      %s191 = sphi 0, %s189
      %s192 = sphi 0, %s191
      %s206 = sphi 0, %s192
      %s210 = sphi 0, %s210
      %s212 = sphi 0, %s210
      %s213 = sphi 0, %s212
      %s227 = sphi 0, %s213
      %s231 = sphi 0, %s231
      %s233 = sphi 0, %s231
      %s234 = sphi 0, %s233
      %s248 = sphi 0, %s234
      %s252 = sphi 0, %s252
      %s254 = sphi 0, %s252
      %s255 = sphi 0, %s254
      %s269 = sphi 0, %s255
      %s273 = sphi 0, %s273
      %s275 = sphi 0, %s273
      %s276 = sphi 0, %s275
      %s290 = sphi 0, %s276
      %s294 = sphi 0, %s294
      %s296 = sphi 0, %s294
      %s297 = sphi 0, %s296
      %s311 = sphi 0, %s297
      %s315 = sphi 0, %s315
      %s317 = sphi 0, %s315
      %s318 = sphi 0, %s317
      %s332 = sphi 0, %s318
      %s336 = sphi 0, %s336
      %s338 = sphi 0, %s336
      %s339 = sphi 0, %s338
      %s353 = sphi 0, %s339
      %s357 = sphi 0, %s357
      %s359 = sphi 0, %s357
      %s360 = sphi 0, %s359
      %s374 = sphi 0, %s360
      %s378 = sphi 0, %s378
      %s380 = sphi 0, %s378
      %s381 = sphi 0, %s380
      %s395 = sphi 0, %s381
      %s403 = sphi 0, %s405
      %s406 = sphi 0, %s403
      %s407 = sphi 0, %s406
      %s423 = sphi 0, %s407
    $region4: #{tpu_custom_call.1} parent=1 // loop_header_branch
      %36 = sbr.rel (%p34) target = $region8
    $region5: #{tpu_custom_call.1} parent=1 // loop_body
      %s38 = ssub.s32 %s33, 1
      %s39 = ssub.s32 %s33, 2
      %s46 = sadd.s32 1, %s41
      %p47 = scmp.ge.s32.totalorder %s46, 2
      %s48 = scalar_select %p47, 0, %s46
      %s49 = sadd.s32 1, %s40
      %s50 = scalar_select %p47, %s49, %s40
      %p51 = scmp.ge.s32.totalorder %s50, 2
      %s52 = scalar_select %p51, 0, %s50
      %s53 = ssub.s32 %s40, %s52
      %p54 = scmp.eq.s32.totalorder %s53, 0
      %s56 = sadd.s32 %s55, 1
      %s57 = scalar_select %p54, %s55, %s56
      %p60 = pneg %p54
      %p61 = scmp.eq.s32.totalorder %s33, 3
      %p62 = por %p60, %p61
      %p63 = scmp.ne.s32.totalorder %s55, %s58
      %p64 = scmp.eq.s32.totalorder %s33, 0
      %p65 = por %p63, %p64
      %p66 = scmp.ne.s32.totalorder %s55, %s58
      %p67 = scmp.eq.s32.totalorder %s38, 3
      %p68 = por %p66, %p67
      %p69 = scmp.ne.s32.totalorder %s58, %s59
      %p70 = scmp.eq.s32.totalorder %s38, 0
      %p71 = por %p69, %p70
      %p72 = scmp.ne.s32.totalorder %s58, %s59
      %p73 = scmp.eq.s32.totalorder %s39, 3
      %p74 = por %p72, %p73
      %p76 = scmp.ne.s32.totalorder %s59, %s75
      %p77 = scmp.eq.s32.totalorder %s39, 0
      %p78 = por %p76, %p77
      %s79 = ssub.s32 %s40, %s52
      %p80 = scmp.eq.s32.totalorder %s79, 0
      %s82 = sadd.s32 %s81, 1
      %s83 = scalar_select %p80, %s81, %s82
      %p86 = pneg %p80
      %p87 = scmp.eq.s32.totalorder %s33, 3
      %p88 = por %p86, %p87
      %p89 = scmp.ne.s32.totalorder %s81, %s84
      %p90 = scmp.eq.s32.totalorder %s33, 0
      %p91 = por %p89, %p90
      %p92 = scmp.ne.s32.totalorder %s81, %s84
      %p93 = scmp.eq.s32.totalorder %s38, 3
      %p94 = por %p92, %p93
      %p95 = scmp.ne.s32.totalorder %s84, %s85
      %p96 = scmp.eq.s32.totalorder %s38, 0
      %p97 = por %p95, %p96
      %p98 = scmp.ne.s32.totalorder %s84, %s85
      %p99 = scmp.eq.s32.totalorder %s39, 3
      %p100 = por %p98, %p99
      %p102 = scmp.ne.s32.totalorder %s85, %s101
      %p103 = scmp.eq.s32.totalorder %s39, 0
      %p104 = por %p102, %p103
      %s106 = sadd.s32 %s105, 1
      %p109 = scmp.eq.s32.totalorder %s33, 3
      %p110 = scmp.ne.s32.totalorder %s105, %s107
      %p111 = scmp.eq.s32.totalorder %s33, 0
      %p112 = por %p110, %p111
      %p113 = scmp.ne.s32.totalorder %s105, %s107
      %p114 = scmp.eq.s32.totalorder %s38, 3
      %p115 = por %p113, %p114
      %p116 = scmp.ne.s32.totalorder %s107, %s108
      %p117 = scmp.eq.s32.totalorder %s38, 0
      %p118 = por %p116, %p117
      %p119 = scmp.ne.s32.totalorder %s107, %s108
      %p120 = scmp.eq.s32.totalorder %s39, 3
      %p121 = por %p119, %p120
      %p123 = scmp.ne.s32.totalorder %s108, %s122
      %p124 = scmp.eq.s32.totalorder %s39, 0
      %p125 = por %p123, %p124
      %s127 = sadd.s32 %s126, 1
      %p130 = scmp.eq.s32.totalorder %s33, 3
      %p131 = scmp.ne.s32.totalorder %s126, %s128
      %p132 = scmp.eq.s32.totalorder %s33, 0
      %p133 = por %p131, %p132
      %p134 = scmp.ne.s32.totalorder %s126, %s128
      %p135 = scmp.eq.s32.totalorder %s38, 3
      %p136 = por %p134, %p135
      %p137 = scmp.ne.s32.totalorder %s128, %s129
      %p138 = scmp.eq.s32.totalorder %s38, 0
      %p139 = por %p137, %p138
      %p140 = scmp.ne.s32.totalorder %s128, %s129
      %p141 = scmp.eq.s32.totalorder %s39, 3
      %p142 = por %p140, %p141
      %p144 = scmp.ne.s32.totalorder %s129, %s143
      %p145 = scmp.eq.s32.totalorder %s39, 0
      %p146 = por %p144, %p145
      %s148 = sadd.s32 %s147, 1
      %p151 = scmp.eq.s32.totalorder %s33, 3
      %p152 = scmp.ne.s32.totalorder %s147, %s149
      %p153 = scmp.eq.s32.totalorder %s33, 0
      %p154 = por %p152, %p153
      %p155 = scmp.ne.s32.totalorder %s147, %s149
      %p156 = scmp.eq.s32.totalorder %s38, 3
      %p157 = por %p155, %p156
      %p158 = scmp.ne.s32.totalorder %s149, %s150
      %p159 = scmp.eq.s32.totalorder %s38, 0
      %p160 = por %p158, %p159
      %p161 = scmp.ne.s32.totalorder %s149, %s150
      %p162 = scmp.eq.s32.totalorder %s39, 3
      %p163 = por %p161, %p162
      %p165 = scmp.ne.s32.totalorder %s150, %s164
      %p166 = scmp.eq.s32.totalorder %s39, 0
      %p167 = por %p165, %p166
      %s169 = sadd.s32 %s168, 1
      %p172 = scmp.eq.s32.totalorder %s33, 3
      %p173 = scmp.ne.s32.totalorder %s168, %s170
      %p174 = scmp.eq.s32.totalorder %s33, 0
      %p175 = por %p173, %p174
      %p176 = scmp.ne.s32.totalorder %s168, %s170
      %p177 = scmp.eq.s32.totalorder %s38, 3
      %p178 = por %p176, %p177
      %p179 = scmp.ne.s32.totalorder %s170, %s171
      %p180 = scmp.eq.s32.totalorder %s38, 0
      %p181 = por %p179, %p180
      %p182 = scmp.ne.s32.totalorder %s170, %s171
      %p183 = scmp.eq.s32.totalorder %s39, 3
      %p184 = por %p182, %p183
      %p186 = scmp.ne.s32.totalorder %s171, %s185
      %p187 = scmp.eq.s32.totalorder %s39, 0
      %p188 = por %p186, %p187
      %s190 = sadd.s32 %s189, 1
      %p193 = scmp.eq.s32.totalorder %s33, 3
      %p194 = scmp.ne.s32.totalorder %s189, %s191
      %p195 = scmp.eq.s32.totalorder %s33, 0
      %p196 = por %p194, %p195
      %p197 = scmp.ne.s32.totalorder %s189, %s191
      %p198 = scmp.eq.s32.totalorder %s38, 3
      %p199 = por %p197, %p198
      %p200 = scmp.ne.s32.totalorder %s191, %s192
      %p201 = scmp.eq.s32.totalorder %s38, 0
      %p202 = por %p200, %p201
      %p203 = scmp.ne.s32.totalorder %s191, %s192
      %p204 = scmp.eq.s32.totalorder %s39, 3
      %p205 = por %p203, %p204
      %p207 = scmp.ne.s32.totalorder %s192, %s206
      %p208 = scmp.eq.s32.totalorder %s39, 0
      %p209 = por %p207, %p208
      %s211 = sadd.s32 %s210, 1
      %p214 = scmp.eq.s32.totalorder %s33, 3
      %p215 = scmp.ne.s32.totalorder %s210, %s212
      %p216 = scmp.eq.s32.totalorder %s33, 0
      %p217 = por %p215, %p216
      %p218 = scmp.ne.s32.totalorder %s210, %s212
      %p219 = scmp.eq.s32.totalorder %s38, 3
      %p220 = por %p218, %p219
      %p221 = scmp.ne.s32.totalorder %s212, %s213
      %p222 = scmp.eq.s32.totalorder %s38, 0
      %p223 = por %p221, %p222
      %p224 = scmp.ne.s32.totalorder %s212, %s213
      %p225 = scmp.eq.s32.totalorder %s39, 3
      %p226 = por %p224, %p225
      %p228 = scmp.ne.s32.totalorder %s213, %s227
      %p229 = scmp.eq.s32.totalorder %s39, 0
      %p230 = por %p228, %p229
      %s232 = sadd.s32 %s231, 1
      %p235 = scmp.eq.s32.totalorder %s33, 3
      %p236 = scmp.ne.s32.totalorder %s231, %s233
      %p237 = scmp.eq.s32.totalorder %s33, 0
      %p238 = por %p236, %p237
      %p239 = scmp.ne.s32.totalorder %s231, %s233
      %p240 = scmp.eq.s32.totalorder %s38, 3
      %p241 = por %p239, %p240
      %p242 = scmp.ne.s32.totalorder %s233, %s234
      %p243 = scmp.eq.s32.totalorder %s38, 0
      %p244 = por %p242, %p243
      %p245 = scmp.ne.s32.totalorder %s233, %s234
      %p246 = scmp.eq.s32.totalorder %s39, 3
      %p247 = por %p245, %p246
      %p249 = scmp.ne.s32.totalorder %s234, %s248
      %p250 = scmp.eq.s32.totalorder %s39, 0
      %p251 = por %p249, %p250
      %s253 = sadd.s32 %s252, 1
      %p256 = scmp.eq.s32.totalorder %s33, 3
      %p257 = scmp.ne.s32.totalorder %s252, %s254
      %p258 = scmp.eq.s32.totalorder %s33, 0
      %p259 = por %p257, %p258
      %p260 = scmp.ne.s32.totalorder %s252, %s254
      %p261 = scmp.eq.s32.totalorder %s38, 3
      %p262 = por %p260, %p261
      %p263 = scmp.ne.s32.totalorder %s254, %s255
      %p264 = scmp.eq.s32.totalorder %s38, 0
      %p265 = por %p263, %p264
      %p266 = scmp.ne.s32.totalorder %s254, %s255
      %p267 = scmp.eq.s32.totalorder %s39, 3
      %p268 = por %p266, %p267
      %p270 = scmp.ne.s32.totalorder %s255, %s269
      %p271 = scmp.eq.s32.totalorder %s39, 0
      %p272 = por %p270, %p271
      %s274 = sadd.s32 %s273, 1
      %p277 = scmp.eq.s32.totalorder %s33, 3
      %p278 = scmp.ne.s32.totalorder %s273, %s275
      %p279 = scmp.eq.s32.totalorder %s33, 0
      %p280 = por %p278, %p279
      %p281 = scmp.ne.s32.totalorder %s273, %s275
      %p282 = scmp.eq.s32.totalorder %s38, 3
      %p283 = por %p281, %p282
      %p284 = scmp.ne.s32.totalorder %s275, %s276
      %p285 = scmp.eq.s32.totalorder %s38, 0
      %p286 = por %p284, %p285
      %p287 = scmp.ne.s32.totalorder %s275, %s276
      %p288 = scmp.eq.s32.totalorder %s39, 3
      %p289 = por %p287, %p288
      %p291 = scmp.ne.s32.totalorder %s276, %s290
      %p292 = scmp.eq.s32.totalorder %s39, 0
      %p293 = por %p291, %p292
      %s295 = sadd.s32 %s294, 1
      %p298 = scmp.eq.s32.totalorder %s33, 3
      %p299 = scmp.ne.s32.totalorder %s294, %s296
      %p300 = scmp.eq.s32.totalorder %s33, 0
      %p301 = por %p299, %p300
      %p302 = scmp.ne.s32.totalorder %s294, %s296
      %p303 = scmp.eq.s32.totalorder %s38, 3
      %p304 = por %p302, %p303
      %p305 = scmp.ne.s32.totalorder %s296, %s297
      %p306 = scmp.eq.s32.totalorder %s38, 0
      %p307 = por %p305, %p306
      %p308 = scmp.ne.s32.totalorder %s296, %s297
      %p309 = scmp.eq.s32.totalorder %s39, 3
      %p310 = por %p308, %p309
      %p312 = scmp.ne.s32.totalorder %s297, %s311
      %p313 = scmp.eq.s32.totalorder %s39, 0
      %p314 = por %p312, %p313
      %s316 = sadd.s32 %s315, 1
      %p319 = scmp.eq.s32.totalorder %s33, 3
      %p320 = scmp.ne.s32.totalorder %s315, %s317
      %p321 = scmp.eq.s32.totalorder %s33, 0
      %p322 = por %p320, %p321
      %p323 = scmp.ne.s32.totalorder %s315, %s317
      %p324 = scmp.eq.s32.totalorder %s38, 3
      %p325 = por %p323, %p324
      %p326 = scmp.ne.s32.totalorder %s317, %s318
      %p327 = scmp.eq.s32.totalorder %s38, 0
      %p328 = por %p326, %p327
      %p329 = scmp.ne.s32.totalorder %s317, %s318
      %p330 = scmp.eq.s32.totalorder %s39, 3
      %p331 = por %p329, %p330
      %p333 = scmp.ne.s32.totalorder %s318, %s332
      %p334 = scmp.eq.s32.totalorder %s39, 0
      %p335 = por %p333, %p334
      %s337 = sadd.s32 %s336, 1
      %p340 = scmp.eq.s32.totalorder %s33, 3
      %p341 = scmp.ne.s32.totalorder %s336, %s338
      %p342 = scmp.eq.s32.totalorder %s33, 0
      %p343 = por %p341, %p342
      %p344 = scmp.ne.s32.totalorder %s336, %s338
      %p345 = scmp.eq.s32.totalorder %s38, 3
      %p346 = por %p344, %p345
      %p347 = scmp.ne.s32.totalorder %s338, %s339
      %p348 = scmp.eq.s32.totalorder %s38, 0
      %p349 = por %p347, %p348
      %p350 = scmp.ne.s32.totalorder %s338, %s339
      %p351 = scmp.eq.s32.totalorder %s39, 3
      %p352 = por %p350, %p351
      %p354 = scmp.ne.s32.totalorder %s339, %s353
      %p355 = scmp.eq.s32.totalorder %s39, 0
      %p356 = por %p354, %p355
      %s358 = sadd.s32 %s357, 1
      %p361 = scmp.eq.s32.totalorder %s33, 3
      %p362 = scmp.ne.s32.totalorder %s357, %s359
      %p363 = scmp.eq.s32.totalorder %s33, 0
      %p364 = por %p362, %p363
      %p365 = scmp.ne.s32.totalorder %s357, %s359
      %p366 = scmp.eq.s32.totalorder %s38, 3
      %p367 = por %p365, %p366
      %p368 = scmp.ne.s32.totalorder %s359, %s360
      %p369 = scmp.eq.s32.totalorder %s38, 0
      %p370 = por %p368, %p369
      %p371 = scmp.ne.s32.totalorder %s359, %s360
      %p372 = scmp.eq.s32.totalorder %s39, 3
      %p373 = por %p371, %p372
      %p375 = scmp.ne.s32.totalorder %s360, %s374
      %p376 = scmp.eq.s32.totalorder %s39, 0
      %p377 = por %p375, %p376
      %s379 = sadd.s32 %s378, 1
      %p382 = scmp.eq.s32.totalorder %s33, 3
      %p383 = scmp.ne.s32.totalorder %s378, %s380
      %p384 = scmp.eq.s32.totalorder %s33, 0
      %p385 = por %p383, %p384
      %p386 = scmp.ne.s32.totalorder %s378, %s380
      %p387 = scmp.eq.s32.totalorder %s38, 3
      %p388 = por %p386, %p387
      %p389 = scmp.ne.s32.totalorder %s380, %s381
      %p390 = scmp.eq.s32.totalorder %s38, 0
      %p391 = por %p389, %p390
      %p392 = scmp.ne.s32.totalorder %s380, %s381
      %p393 = scmp.eq.s32.totalorder %s39, 3
      %p394 = por %p392, %p393
      %p396 = scmp.ne.s32.totalorder %s381, %s395
      %p397 = scmp.eq.s32.totalorder %s39, 0
      %p398 = por %p396, %p397
      %s399 = ssub.s32 %s40, %s52
      %s400 = ssub.s32 %s41, %s48
      %s401 = sor.u32 %s399, %s400
      %p402 = scmp.eq.s32.totalorder %s401, 0
      %s404 = sadd.s32 %s403, 1
      %s405 = scalar_select %p402, %s403, %s404
      %p408 = pneg %p402
      %p409 = scmp.eq.s32.totalorder %s33, 3
      %p410 = por %p408, %p409
      %p411 = scmp.ne.s32.totalorder %s403, %s406
      %p412 = scmp.eq.s32.totalorder %s33, 0
      %p413 = por %p411, %p412
      %p414 = scmp.ne.s32.totalorder %s403, %s406
      %p415 = scmp.eq.s32.totalorder %s38, 3
      %p416 = por %p414, %p415
      %p417 = scmp.ne.s32.totalorder %s406, %s407
      %p418 = scmp.eq.s32.totalorder %s38, 0
      %p419 = por %p417, %p418
      %p420 = scmp.ne.s32.totalorder %s406, %s407
      %p421 = scmp.eq.s32.totalorder %s39, 3
      %p422 = por %p420, %p421
      %p424 = scmp.ne.s32.totalorder %s407, %s423
      %p425 = scmp.eq.s32.totalorder %s39, 0
      %p426 = por %p424, %p425
      %p427 = scmp.le.s32.totalorder 1, %s33
      %p428 = scmp.lt.s32.totalorder %s33, 5
      %p429 = pnand %p427, %p428
      %p430 = pneg %p429
      // Predicated region
      $region9: #{tpu_custom_call.1} parent=5 // pred_check
        _
      $region10: #{tpu_custom_call.1} parent=5 // pred_check_branch
        %432 = sbr.rel (%p429) target = $region12
      $region11: #{tpu_custom_call.1} parent=5 // pred_region
        %s433 = ssub.s32 %s33, 1
        // Predicated region
        $region13: #{tpu_custom_call.1} parent=11 // pred_check
          %p434 = pneg %p118
        $region14: #{tpu_custom_call.1} parent=11 // pred_check_branch
          %436 = sbr.rel (%p434) target = $region16
        $region15: #{tpu_custom_call.1} parent=11 // pred_region
          %s438 = ssub.s32 2048, 2048
          %439 = vsyncadd [#allocation9], %s438
          %s440 = sshll.u32 [#allocation10], 4
          %s441 = int_to_ptr.vmem [resolvable:$true] %s440
          %446 = dma.hbm_to_vmem [thread:$0]  %s2, 2048, %s441, [#allocation9], 128, 128, 8
        $region16: #{tpu_custom_call.1} parent=11 // pred_fallthru
          _
        // Predicated region
        $region17: #{tpu_custom_call.1} parent=11 // pred_check
          %p447 = pneg %p139
        $region18: #{tpu_custom_call.1} parent=11 // pred_check_branch
          %449 = sbr.rel (%p447) target = $region20
        $region19: #{tpu_custom_call.1} parent=11 // pred_region
          _
        $region20: #{tpu_custom_call.1} parent=11 // pred_fallthru
          _
        // Predicated region
        $region21: #{tpu_custom_call.1} parent=11 // pred_check
          %p450 = pneg %p160
        $region22: #{tpu_custom_call.1} parent=11 // pred_check_branch
          %452 = sbr.rel (%p450) target = $region24
        $region23: #{tpu_custom_call.1} parent=11 // pred_region
          %s454 = ssub.s32 1024, 1024
          %455 = vsyncadd [#allocation12], %s454
          %s456 = sshll.u32 [#allocation11], 4
          %s457 = int_to_ptr.vmem [resolvable:$true] %s456
          %462 = dma.hbm_to_vmem [thread:$0]  %s4, 1024, %s457, [#allocation12], 64, 64, 4
        $region24: #{tpu_custom_call.1} parent=11 // pred_fallthru
          _
        // Predicated region
        $region25: #{tpu_custom_call.1} parent=11 // pred_check
          %p463 = pneg %p181
        $region26: #{tpu_custom_call.1} parent=11 // pred_check_branch
          %465 = sbr.rel (%p463) target = $region28
        $region27: #{tpu_custom_call.1} parent=11 // pred_region
          _
        $region28: #{tpu_custom_call.1} parent=11 // pred_fallthru
          _
        // Predicated region
        $region29: #{tpu_custom_call.1} parent=11 // pred_check
          %p466 = pneg %p202
        $region30: #{tpu_custom_call.1} parent=11 // pred_check_branch
          %468 = sbr.rel (%p466) target = $region32
        $region31: #{tpu_custom_call.1} parent=11 // pred_region
          %s470 = ssub.s32 1024, 1024
          %471 = vsyncadd [#allocation12], %s470
          %s472 = sshll.u32 [#allocation13], 4
          %s473 = int_to_ptr.vmem [resolvable:$true] %s472
          %478 = dma.hbm_to_vmem [thread:$0]  %s6, 1024, %s473, [#allocation12], 64, 64, 4
        $region32: #{tpu_custom_call.1} parent=11 // pred_fallthru
          _
        // Predicated region
        $region33: #{tpu_custom_call.1} parent=11 // pred_check
          %p479 = pneg %p223
        $region34: #{tpu_custom_call.1} parent=11 // pred_check_branch
          %481 = sbr.rel (%p479) target = $region36
        $region35: #{tpu_custom_call.1} parent=11 // pred_region
          _
        $region36: #{tpu_custom_call.1} parent=11 // pred_fallthru
          _
        // Predicated region
        $region37: #{tpu_custom_call.1} parent=11 // pred_check
          %p482 = pneg %p244
        $region38: #{tpu_custom_call.1} parent=11 // pred_check_branch
          %484 = sbr.rel (%p482) target = $region40
        $region39: #{tpu_custom_call.1} parent=11 // pred_region
          %s486 = ssub.s32 2048, 2048
          %487 = vsyncadd [#allocation15], %s486
          %s488 = sshll.u32 [#allocation14], 4
          %s489 = int_to_ptr.vmem [resolvable:$true] %s488
          %494 = dma.hbm_to_vmem [thread:$0]  %s8, 2048, %s489, [#allocation15], 128, 128, 8
        $region40: #{tpu_custom_call.1} parent=11 // pred_fallthru
          _
        // Predicated region
        $region41: #{tpu_custom_call.1} parent=11 // pred_check
          %p495 = pneg %p265
        $region42: #{tpu_custom_call.1} parent=11 // pred_check_branch
          %497 = sbr.rel (%p495) target = $region44
        $region43: #{tpu_custom_call.1} parent=11 // pred_region
          _
        $region44: #{tpu_custom_call.1} parent=11 // pred_fallthru
          _
        // Predicated region
        $region45: #{tpu_custom_call.1} parent=11 // pred_check
          %p498 = pneg %p286
        $region46: #{tpu_custom_call.1} parent=11 // pred_check_branch
          %500 = sbr.rel (%p498) target = $region48
        $region47: #{tpu_custom_call.1} parent=11 // pred_region
          %s502 = ssub.s32 2048, 2048
          %503 = vsyncadd [#allocation15], %s502
          %s504 = sshll.u32 [#allocation16], 4
          %s505 = int_to_ptr.vmem [resolvable:$true] %s504
          %510 = dma.hbm_to_vmem [thread:$0]  %s10, 2048, %s505, [#allocation15], 64, 64, 4
        $region48: #{tpu_custom_call.1} parent=11 // pred_fallthru
          _
        // Predicated region
        $region49: #{tpu_custom_call.1} parent=11 // pred_check
          %p511 = pneg %p307
        $region50: #{tpu_custom_call.1} parent=11 // pred_check_branch
          %513 = sbr.rel (%p511) target = $region52
        $region51: #{tpu_custom_call.1} parent=11 // pred_region
          _
        $region52: #{tpu_custom_call.1} parent=11 // pred_fallthru
          _
        // Predicated region
        $region53: #{tpu_custom_call.1} parent=11 // pred_check
          %p514 = pneg %p328
        $region54: #{tpu_custom_call.1} parent=11 // pred_check_branch
          %516 = sbr.rel (%p514) target = $region56
        $region55: #{tpu_custom_call.1} parent=11 // pred_region
          _
        $region56: #{tpu_custom_call.1} parent=11 // pred_fallthru
          _
        // Predicated region
        $region57: #{tpu_custom_call.1} parent=11 // pred_check
          %p517 = pneg %p349
        $region58: #{tpu_custom_call.1} parent=11 // pred_check_branch
          %519 = sbr.rel (%p517) target = $region60
        $region59: #{tpu_custom_call.1} parent=11 // pred_region
          _
        $region60: #{tpu_custom_call.1} parent=11 // pred_fallthru
          _
        // Predicated region
        $region61: #{tpu_custom_call.1} parent=11 // pred_check
          %p520 = pneg %p370
        $region62: #{tpu_custom_call.1} parent=11 // pred_check_branch
          %522 = sbr.rel (%p520) target = $region64
        $region63: #{tpu_custom_call.1} parent=11 // pred_region
          _
        $region64: #{tpu_custom_call.1} parent=11 // pred_fallthru
          _
        // Predicated region
        $region65: #{tpu_custom_call.1} parent=11 // pred_check
          %p523 = pneg %p391
        $region66: #{tpu_custom_call.1} parent=11 // pred_check_branch
          %525 = sbr.rel (%p523) target = $region68
        $region67: #{tpu_custom_call.1} parent=11 // pred_region
          _
        $region68: #{tpu_custom_call.1} parent=11 // pred_fallthru
          _
      $region12: #{tpu_custom_call.1} parent=5 // pred_fallthru
        _
      %p526 = scmp.lt.s32.totalorder %s33, 4
      // Predicated region
      $region69: #{tpu_custom_call.1} parent=5 // pred_check
        %p527 = pneg %p526
      $region70: #{tpu_custom_call.1} parent=5 // pred_check_branch
        %529 = sbr.rel (%p527) target = $region72
      $region71: #{tpu_custom_call.1} parent=5 // pred_region
        // Predicated region
        $region73: #{tpu_custom_call.1} parent=71 // pred_check
          %p530 = pneg %p65
        $region74: #{tpu_custom_call.1} parent=71 // pred_check_branch
          %532 = sbr.rel (%p530) target = $region76
        $region75: #{tpu_custom_call.1} parent=71 // pred_region
          %s533 = sand.u32 %s55, 1
          %s534 = scalar_lea.sflag [#allocation6], %s533
          %s535 = sand.u32 %s55, 1
          %s536 = smul.addr %s535, 16
          %s537 = scalar_lea.vmem [#allocation5], %s536
          %s539 = ssub.s32 256, 256
          %540 = vsyncadd %s534, %s539
          %s541 = smul.addr %s40, 2
          %s542 = smul.addr %s541, 128
          %s543 = scalar_lea.hbm %s0, %s542
          %s544 = sshll.u32 %s537, 4
          %s545 = int_to_ptr.vmem [resolvable:$true] %s544
          %550 = dma.hbm_to_vmem [thread:$0]  %s543, 256, %s545, %s534, 128, 128, 8
        $region76: #{tpu_custom_call.1} parent=71 // pred_fallthru
          _
        // Predicated region
        $region77: #{tpu_custom_call.1} parent=71 // pred_check
          %p551 = pneg %p91
        $region78: #{tpu_custom_call.1} parent=71 // pred_check_branch
          %553 = sbr.rel (%p551) target = $region80
        $region79: #{tpu_custom_call.1} parent=71 // pred_region
          %s554 = sand.u32 %s33, 1
          %s555 = scalar_lea.sflag [#allocation9], %s554
          %s556 = sand.u32 %s81, 1
          %s557 = smul.addr %s556, 16
          %s558 = scalar_lea.vmem [#allocation8], %s557
          %s560 = ssub.s32 256, 256
          %561 = vsyncadd %s555, %s560
          %s562 = smul.addr %s40, 2
          %s563 = smul.addr %s562, 128
          %s564 = scalar_lea.hbm %s1, %s563
          %s565 = sshll.u32 %s558, 4
          %s566 = int_to_ptr.vmem [resolvable:$true] %s565
          %571 = dma.hbm_to_vmem [thread:$0]  %s564, 256, %s566, %s555, 128, 128, 8
        $region80: #{tpu_custom_call.1} parent=71 // pred_fallthru
          _
      $region72: #{tpu_custom_call.1} parent=5 // pred_fallthru
        _
      %p572 = scmp.le.s32.totalorder 1, %s33
      %p573 = scmp.lt.s32.totalorder %s33, 5
      %p574 = pnand %p572, %p573
      %p575 = pneg %p574
      // Predicated region
      $region81: #{tpu_custom_call.1} parent=5 // pred_check
        _
      $region82: #{tpu_custom_call.1} parent=5 // pred_check_branch
        %577 = sbr.rel (%p574) target = $region84
      $region83: #{tpu_custom_call.1} parent=5 // pred_region
        %s578 = ssub.s32 %s33, 1
        %s579 = sand.u32 %s58, 1
        %s580 = scalar_lea.sflag [#allocation6], %s579
        %s581 = sand.u32 %s58, 1
        %s582 = smul.addr %s581, 16
        %s583 = scalar_lea.vmem [#allocation5], %s582
        // Predicated region
        $region85: #{tpu_custom_call.1} parent=83 // pred_check
          %p584 = pneg %p71
        $region86: #{tpu_custom_call.1} parent=83 // pred_check_branch
          %586 = sbr.rel (%p584) target = $region88
        $region87: #{tpu_custom_call.1} parent=83 // pred_region
          %587 = dma.done %s580, 256
        $region88: #{tpu_custom_call.1} parent=83 // pred_fallthru
          _
        %s588 = sand.u32 %s38, 1
        %s589 = scalar_lea.sflag [#allocation9], %s588
        %s590 = sand.u32 %s84, 1
        %s591 = smul.addr %s590, 16
        %s592 = scalar_lea.vmem [#allocation8], %s591
        // Predicated region
        $region89: #{tpu_custom_call.1} parent=83 // pred_check
          %p593 = pneg %p97
        $region90: #{tpu_custom_call.1} parent=83 // pred_check_branch
          %595 = sbr.rel (%p593) target = $region92
        $region91: #{tpu_custom_call.1} parent=83 // pred_region
          %596 = dma.done %s589, 256
        $region92: #{tpu_custom_call.1} parent=83 // pred_fallthru
          _
        // Predicated region
        $region93: #{tpu_custom_call.1} parent=83 // pred_check
          %p597 = pneg %p118
        $region94: #{tpu_custom_call.1} parent=83 // pred_check_branch
          %599 = sbr.rel (%p597) target = $region96
        $region95: #{tpu_custom_call.1} parent=83 // pred_region
          %600 = dma.done [#allocation9], 2048
        $region96: #{tpu_custom_call.1} parent=83 // pred_fallthru
          _
        // Predicated region
        $region97: #{tpu_custom_call.1} parent=83 // pred_check
          %p601 = pneg %p160
        $region98: #{tpu_custom_call.1} parent=83 // pred_check_branch
          %603 = sbr.rel (%p601) target = $region100
        $region99: #{tpu_custom_call.1} parent=83 // pred_region
          %604 = dma.done [#allocation12], 1024
        $region100: #{tpu_custom_call.1} parent=83 // pred_fallthru
          _
        // Predicated region
        $region101: #{tpu_custom_call.1} parent=83 // pred_check
          %p605 = pneg %p202
        $region102: #{tpu_custom_call.1} parent=83 // pred_check_branch
          %607 = sbr.rel (%p605) target = $region104
        $region103: #{tpu_custom_call.1} parent=83 // pred_region
          %608 = dma.done [#allocation12], 1024
        $region104: #{tpu_custom_call.1} parent=83 // pred_fallthru
          _
        // Predicated region
        $region105: #{tpu_custom_call.1} parent=83 // pred_check
          %p609 = pneg %p244
        $region106: #{tpu_custom_call.1} parent=83 // pred_check_branch
          %611 = sbr.rel (%p609) target = $region108
        $region107: #{tpu_custom_call.1} parent=83 // pred_region
          %612 = dma.done [#allocation15], 2048
        $region108: #{tpu_custom_call.1} parent=83 // pred_fallthru
          _
        // Predicated region
        $region109: #{tpu_custom_call.1} parent=83 // pred_check
          %p613 = pneg %p286
        $region110: #{tpu_custom_call.1} parent=83 // pred_check_branch
          %615 = sbr.rel (%p613) target = $region112
        $region111: #{tpu_custom_call.1} parent=83 // pred_region
          %616 = dma.done [#allocation15], 2048
        $region112: #{tpu_custom_call.1} parent=83 // pred_fallthru
          _
        %s617 = sand.u32 %s58, 1
        %s618 = scalar_lea.sflag [#allocation6], %s617
        %s619 = sand.u32 %s58, 1
        %s620 = smul.addr %s619, 16
        %s621 = scalar_lea.vmem [#allocation5], %s620
        %p622 = pneg %p71
        %p623 = pneg %p68
        %s624 = sand.u32 %s38, 1
        %s625 = scalar_lea.sflag [#allocation9], %s624
        %s626 = sand.u32 %s84, 1
        %s627 = smul.addr %s626, 16
        %s628 = scalar_lea.vmem [#allocation8], %s627
        %p629 = pneg %p97
        %p630 = pneg %p94
        %p631 = pneg %p118
        %p632 = pneg %p115
        %p633 = pneg %p139
        %p634 = pneg %p136
        %p635 = pneg %p160
        %p636 = pneg %p157
        %p637 = pneg %p181
        %p638 = pneg %p178
        %p639 = pneg %p202
        %p640 = pneg %p199
        %p641 = pneg %p223
        %p642 = pneg %p220
        %p643 = pneg %p244
        %p644 = pneg %p241
        %p645 = pneg %p265
        %p646 = pneg %p262
        %p647 = pneg %p286
        %p648 = pneg %p283
        %p649 = pneg %p307
        %p650 = pneg %p304
        %p651 = pneg %p328
        %p652 = pneg %p325
        %p653 = pneg %p349
        %p654 = pneg %p346
        %p655 = pneg %p370
        %p656 = pneg %p367
        %p657 = pneg %p391
        %p658 = pneg %p388
        %p659 = pneg %p419
        %p660 = pneg %p416
        %s661 = sand.u32 %s406, 1
        %s662 = scalar_lea.sflag [#allocation7], %s661
        %s663 = sand.u32 %s406, 1
        %s664 = smul.addr %s663, 8
        %s665 = scalar_lea.vmem [#allocation17], %s664
        %p667 = scmp.eq.s32.totalorder %s43, 0
        // Predicated region
        $region113: #{tpu_custom_call.1} parent=83 // pred_check
          %p668 = pneg %p667
        $region114: #{tpu_custom_call.1} parent=83 // pred_check_branch
          %670 = sbr.rel (%p668) target = $region116
        $region115: #{tpu_custom_call.1} parent=83 // pred_region
          %v671 = vld [vmem:[%s583] sm:$0xff]
          %v672 = vld [vmem:[%s583 + $0x8] sm:$0xff]
          %v673 = vld [vmem:[%s592] sm:$0xff]
          %v674 = vld [vmem:[%s592 + $0x8] sm:$0xff]
          %v675 = vadd.f32 %v671, %v673
          %v676 = vadd.f32 %v672, %v674
          %v677 = vpack.c.bf16 %v676, %v675
          %v678 = vld [vmem:[#allocation10] sm:$0xff]
          %v679 = vld [vmem:[#allocation10 + $0x8] sm:$0xff]
          %v680 = vld [vmem:[#allocation10 + $0x10] sm:$0xff]
          %v681 = vld [vmem:[#allocation10 + $0x18] sm:$0xff]
          %v682 = vld [vmem:[#allocation10 + $0x20] sm:$0xff]
          %v683 = vld [vmem:[#allocation10 + $0x28] sm:$0xff]
          %v684 = vld [vmem:[#allocation10 + $0x30] sm:$0xff]
          %v685 = vld [vmem:[#allocation10 + $0x38] sm:$0xff]
          %v686 = vld [vmem:[#allocation10 + $0x40] sm:$0xff]
          %v687 = vld [vmem:[#allocation10 + $0x48] sm:$0xff]
          %v688 = vld [vmem:[#allocation10 + $0x50] sm:$0xff]
          %v689 = vld [vmem:[#allocation10 + $0x58] sm:$0xff]
          %v690 = vld [vmem:[#allocation10 + $0x60] sm:$0xff]
          %v691 = vld [vmem:[#allocation10 + $0x68] sm:$0xff]
          %v692 = vld [vmem:[#allocation10 + $0x70] sm:$0xff]
          %v693 = vld [vmem:[#allocation10 + $0x78] sm:$0xff]
          %v694 = vld [vmem:[%s3] sm:$0x3]
          %v696 = vlaneseq
          %v697 = vshrl.u32 %v696, 7
          %v698 = vsub.s32 0, %v697
          %v699 = vrot.slane %v694, %v698
          %v700 = vlaneseq
          %v701 = vshrl.u32 %v700, 7
          %v702 = vsub.s32 1, %v701
          %v703 = vrot.slane %v694, %v702
          %v722 = vunpack.c.l.b16 %v678
          %v723 = vunpack.c.h.b16 %v678
          %v724 = vunpack.c.l.b16 %v679
          %v725 = vunpack.c.h.b16 %v679
          %v726 = vunpack.c.l.b16 %v680
          %v727 = vunpack.c.h.b16 %v680
          %v728 = vunpack.c.l.b16 %v681
          %v729 = vunpack.c.h.b16 %v681
          %v730 = vunpack.c.l.b16 %v682
          %v731 = vunpack.c.h.b16 %v682
          %v732 = vunpack.c.l.b16 %v683
          %v733 = vunpack.c.h.b16 %v683
          %v734 = vunpack.c.l.b16 %v684
          %v735 = vunpack.c.h.b16 %v684
          %v736 = vunpack.c.l.b16 %v685
          %v737 = vunpack.c.h.b16 %v685
          %v738 = vunpack.c.l.b16 %v686
          %v739 = vunpack.c.h.b16 %v686
          %v740 = vunpack.c.l.b16 %v687
          %v741 = vunpack.c.h.b16 %v687
          %v742 = vunpack.c.l.b16 %v688
          %v743 = vunpack.c.h.b16 %v688
          %v744 = vunpack.c.l.b16 %v689
          %v745 = vunpack.c.h.b16 %v689
          %v746 = vunpack.c.l.b16 %v690
          %v747 = vunpack.c.h.b16 %v690
          %v748 = vunpack.c.l.b16 %v691
          %v749 = vunpack.c.h.b16 %v691
          %v750 = vunpack.c.l.b16 %v692
          %v751 = vunpack.c.h.b16 %v692
          %v752 = vunpack.c.l.b16 %v693
          %v753 = vunpack.c.h.b16 %v693
          %v754 = vpack.c.b16 %v724, %v722
          %v755 = vpack.c.b16 %v725, %v723
          %v756 = vpack.c.b16 %v728, %v726
          %v757 = vpack.c.b16 %v729, %v727
          %v758 = vpack.c.b16 %v732, %v730
          %v759 = vpack.c.b16 %v733, %v731
          %v760 = vpack.c.b16 %v736, %v734
          %v761 = vpack.c.b16 %v737, %v735
          %v762 = vpack.c.b16 %v740, %v738
          %v763 = vpack.c.b16 %v741, %v739
          %v764 = vpack.c.b16 %v744, %v742
          %v765 = vpack.c.b16 %v745, %v743
          %v766 = vpack.c.b16 %v748, %v746
          %v767 = vpack.c.b16 %v749, %v747
          %v768 = vpack.c.b16 %v752, %v750
          %v769 = vpack.c.b16 %v753, %v751
          %786 = vmatprep.subr.bf16.mxu0 %v769
          %787 = vmatpush1.bf16.msra.mxu0 %v768
          %788 = vmatprep.subr.bf16.mxu0 %v767
          %789 = vmatpush1.bf16.msra.mxu0 %v766
          %790 = vmatprep.subr.bf16.mxu0 %v765
          %791 = vmatpush1.bf16.msra.mxu0 %v764
          %792 = vmatprep.subr.bf16.mxu0 %v763
          %793 = vmatpush1.bf16.msra.mxu0 %v762
          %794 = vmatprep.subr.bf16.mxu0 %v761
          %795 = vmatpush1.bf16.msra.mxu0 %v760
          %796 = vmatprep.subr.bf16.mxu0 %v759
          %797 = vmatpush1.bf16.msra.mxu0 %v758
          %798 = vmatprep.subr.bf16.mxu0 %v757
          %799 = vmatpush1.bf16.msra.mxu0 %v756
          %800 = vmatprep.subr.bf16.mxu0 %v755
          %801 = vmatpush1.bf16.msra.mxu0 %v754
          %802 = vmatprep.subr.bf16.mxu0 0
          %803 = vmatpush2.bf16.msra.mxu0 0
          %804 = vmatprep.subr.bf16.mxu0 0
          %805 = vmatpush2.bf16.msra.mxu0 0
          %806 = vmatprep.subr.bf16.mxu0 0
          %807 = vmatpush2.bf16.msra.mxu0 0
          %808 = vmatprep.subr.bf16.mxu0 0
          %809 = vmatpush2.bf16.msra.mxu0 0
          %810 = vmatprep.subr.bf16.mxu0 0
          %811 = vmatpush2.bf16.msra.mxu0 0
          %812 = vmatprep.subr.bf16.mxu0 0
          %813 = vmatpush2.bf16.msra.mxu0 0
          %814 = vmatprep.subr.bf16.mxu0 0
          %815 = vmatpush2.bf16.msra.mxu0 0
          %816 = vmatprep.subr.bf16.mxu0 0
          %817 = vmatpush2.bf16.msra.mxu0 0
          %818 = vmatprep.mubr.bf16.mxu0 0
          %819 = vmatmul.mubr.bf16.gmra.mxu0 %v677
          %v820 = vpop.f32.mrf.mxu0
          %v821 = vadd.f32 %v699, %v820
          %v822 = vpop.f32.mrf.mxu0
          %v823 = vadd.f32 %v703, %v822
          %v824 = vpop.f32.mrf.mxu0
          %v825 = vadd.f32 %v699, %v824
          %v826 = vpop.f32.mrf.mxu0
          %v827 = vadd.f32 %v703, %v826
          %828 = vdwg.mxu0
          %v829 = vpack.c.bf16 %v672, %v671
          %v830 = vld [vmem:[#allocation11] sm:$0xf]
          %v831 = vld [vmem:[#allocation11 + $0x4] sm:$0xf]
          %v832 = vld [vmem:[#allocation11 + $0x8] sm:$0xf]
          %v833 = vld [vmem:[#allocation11 + $0xc] sm:$0xf]
          %v834 = vld [vmem:[#allocation11 + $0x10] sm:$0xf]
          %v835 = vld [vmem:[#allocation11 + $0x14] sm:$0xf]
          %v836 = vld [vmem:[#allocation11 + $0x18] sm:$0xf]
          %v837 = vld [vmem:[#allocation11 + $0x1c] sm:$0xf]
          %v838 = vld [vmem:[#allocation11 + $0x20] sm:$0xf]
          %v839 = vld [vmem:[#allocation11 + $0x24] sm:$0xf]
          %v840 = vld [vmem:[#allocation11 + $0x28] sm:$0xf]
          %v841 = vld [vmem:[#allocation11 + $0x2c] sm:$0xf]
          %v842 = vld [vmem:[#allocation11 + $0x30] sm:$0xf]
          %v843 = vld [vmem:[#allocation11 + $0x34] sm:$0xf]
          %v844 = vld [vmem:[#allocation11 + $0x38] sm:$0xf]
          %v845 = vld [vmem:[#allocation11 + $0x3c] sm:$0xf]
          %v846 = vld [vmem:[%s5] sm:$0x1]
          %v848 = vlaneseq
          %v849 = vshrl.u32 %v848, 7
          %v850 = vsub.s32 0, %v849
          %v851 = vrot.slane %v846, %v850
          %v869 = vunpack.c.l.b16 %v830
          %v870 = vunpack.c.l.b16 %v831
          %v871 = vunpack.c.l.b16 %v832
          %v872 = vunpack.c.l.b16 %v833
          %v873 = vunpack.c.l.b16 %v834
          %v874 = vunpack.c.l.b16 %v835
          %v875 = vunpack.c.l.b16 %v836
          %v876 = vunpack.c.l.b16 %v837
          %v877 = vunpack.c.l.b16 %v838
          %v878 = vunpack.c.l.b16 %v839
          %v879 = vunpack.c.l.b16 %v840
          %v880 = vunpack.c.l.b16 %v841
          %v881 = vunpack.c.l.b16 %v842
          %v882 = vunpack.c.l.b16 %v843
          %v883 = vunpack.c.l.b16 %v844
          %v884 = vunpack.c.l.b16 %v845
          %v885 = vpack.c.b16 %v870, %v869
          %v886 = vpack.c.b16 %v872, %v871
          %v887 = vpack.c.b16 %v874, %v873
          %v888 = vpack.c.b16 %v876, %v875
          %v889 = vpack.c.b16 %v878, %v877
          %v890 = vpack.c.b16 %v880, %v879
          %v891 = vpack.c.b16 %v882, %v881
          %v892 = vpack.c.b16 %v884, %v883
          %901 = vmatprep.subr.bf16.mxu0 0
          %902 = vmatpush1.bf16.msra.mxu0 %v892
          %903 = vmatprep.subr.bf16.mxu0 0
          %904 = vmatpush1.bf16.msra.mxu0 %v891
          %905 = vmatprep.subr.bf16.mxu0 0
          %906 = vmatpush1.bf16.msra.mxu0 %v890
          %907 = vmatprep.subr.bf16.mxu0 0
          %908 = vmatpush1.bf16.msra.mxu0 %v889
          %909 = vmatprep.subr.bf16.mxu0 0
          %910 = vmatpush1.bf16.msra.mxu0 %v888
          %911 = vmatprep.subr.bf16.mxu0 0
          %912 = vmatpush1.bf16.msra.mxu0 %v887
          %913 = vmatprep.subr.bf16.mxu0 0
          %914 = vmatpush1.bf16.msra.mxu0 %v886
          %915 = vmatprep.subr.bf16.mxu0 0
          %916 = vmatpush1.bf16.msra.mxu0 %v885
          %917 = vmatprep.subr.bf16.mxu0 0
          %918 = vmatpush2.bf16.msra.mxu0 0
          %919 = vmatprep.subr.bf16.mxu0 0
          %920 = vmatpush2.bf16.msra.mxu0 0
          %921 = vmatprep.subr.bf16.mxu0 0
          %922 = vmatpush2.bf16.msra.mxu0 0
          %923 = vmatprep.subr.bf16.mxu0 0
          %924 = vmatpush2.bf16.msra.mxu0 0
          %925 = vmatprep.subr.bf16.mxu0 0
          %926 = vmatpush2.bf16.msra.mxu0 0
          %927 = vmatprep.subr.bf16.mxu0 0
          %928 = vmatpush2.bf16.msra.mxu0 0
          %929 = vmatprep.subr.bf16.mxu0 0
          %930 = vmatpush2.bf16.msra.mxu0 0
          %931 = vmatprep.subr.bf16.mxu0 0
          %932 = vmatpush2.bf16.msra.mxu0 0
          %933 = vmatprep.mubr.bf16.mxu0 0
          %934 = vmatmul.mubr.bf16.gmra.mxu0 %v829
          %v935 = vpop.f32.mrf.mxu0
          %v936 = vadd.f32 %v851, %v935
          %v937 = vpop.f32.mrf.mxu0
          %v938 = vpop.f32.mrf.mxu0
          %v939 = vadd.f32 %v851, %v938
          %v940 = vpop.f32.mrf.mxu0
          %941 = vdwg.mxu0
          %v942 = vpack.c.bf16 %v825, %v821
          %944 = vrot.lane.b32.xlu0 %v942, 96
          %v945 = vpop.permute.xlu0 %944
          %946 = vrot.lane.b32.xlu0 %v942, 64
          %v947 = vpop.permute.xlu0 %946
          %948 = vrot.lane.b32.xlu0 %v942, 32
          %v949 = vpop.permute.xlu0 %948
          %v950 = vunpack.c.l.b16 %v942
          %v951 = vunpack.c.h.b16 %v942
          %v952 = vunpack.c.l.b16 %v945
          %v953 = vunpack.c.h.b16 %v945
          %v954 = vunpack.c.l.b16 %v947
          %v955 = vunpack.c.h.b16 %v947
          %v956 = vunpack.c.l.b16 %v949
          %v957 = vunpack.c.h.b16 %v949
          %v958 = vpack.c.b16 %v950, %v950
          %v959 = vpack.c.b16 %v951, %v951
          %v960 = vpack.c.b16 %v952, %v952
          %v961 = vpack.c.b16 %v953, %v953
          %v962 = vpack.c.b16 %v954, %v954
          %v963 = vpack.c.b16 %v955, %v955
          %v964 = vpack.c.b16 %v956, %v956
          %v965 = vpack.c.b16 %v957, %v957
          %vm974 = vcmask 257024
          %975 = vst.msk [vmem:[#allocation2] sm:$0xf] %vm974, %v958
          %976 = vst.msk [vmem:[#allocation2 + $0x4] sm:$0xf] %vm974, %v959
          %977 = vst.msk [vmem:[#allocation2 + $0x8] sm:$0xf] %vm974, %v960
          %978 = vst.msk [vmem:[#allocation2 + $0xc] sm:$0xf] %vm974, %v961
          %979 = vst.msk [vmem:[#allocation2 + $0x10] sm:$0xf] %vm974, %v962
          %980 = vst.msk [vmem:[#allocation2 + $0x14] sm:$0xf] %vm974, %v963
          %981 = vst.msk [vmem:[#allocation2 + $0x18] sm:$0xf] %vm974, %v964
          %982 = vst.msk [vmem:[#allocation2 + $0x1c] sm:$0xf] %vm974, %v965
          %v983 = vpack.c.bf16 %v827, %v823
          %985 = vrot.lane.b32.xlu0 %v983, 96
          %v986 = vpop.permute.xlu0 %985
          %987 = vrot.lane.b32.xlu0 %v983, 64
          %v988 = vpop.permute.xlu0 %987
          %989 = vrot.lane.b32.xlu0 %v983, 32
          %v990 = vpop.permute.xlu0 %989
          %v991 = vunpack.c.l.b16 %v983
          %v992 = vunpack.c.h.b16 %v983
          %v993 = vunpack.c.l.b16 %v986
          %v994 = vunpack.c.h.b16 %v986
          %v995 = vunpack.c.l.b16 %v988
          %v996 = vunpack.c.h.b16 %v988
          %v997 = vunpack.c.l.b16 %v990
          %v998 = vunpack.c.h.b16 %v990
          %v999 = vpack.c.b16 %v991, %v991
          %v1000 = vpack.c.b16 %v992, %v992
          %v1001 = vpack.c.b16 %v993, %v993
          %v1002 = vpack.c.b16 %v994, %v994
          %v1003 = vpack.c.b16 %v995, %v995
          %v1004 = vpack.c.b16 %v996, %v996
          %v1005 = vpack.c.b16 %v997, %v997
          %v1006 = vpack.c.b16 %v998, %v998
          %1015 = vst.msk [vmem:[#allocation3] sm:$0xf] %vm974, %v999
          %1016 = vst.msk [vmem:[#allocation3 + $0x4] sm:$0xf] %vm974, %v1000
          %1017 = vst.msk [vmem:[#allocation3 + $0x8] sm:$0xf] %vm974, %v1001
          %1018 = vst.msk [vmem:[#allocation3 + $0xc] sm:$0xf] %vm974, %v1002
          %1019 = vst.msk [vmem:[#allocation3 + $0x10] sm:$0xf] %vm974, %v1003
          %1020 = vst.msk [vmem:[#allocation3 + $0x14] sm:$0xf] %vm974, %v1004
          %1021 = vst.msk [vmem:[#allocation3 + $0x18] sm:$0xf] %vm974, %v1005
          %1022 = vst.msk [vmem:[#allocation3 + $0x1c] sm:$0xf] %vm974, %v1006
          %v1023 = vpack.c.bf16 %v939, %v936
          %1025 = vrot.lane.b32.xlu0 %v1023, 96
          %v1026 = vpop.permute.xlu0 %1025
          %1027 = vrot.lane.b32.xlu0 %v1023, 64
          %v1028 = vpop.permute.xlu0 %1027
          %1029 = vrot.lane.b32.xlu0 %v1023, 32
          %v1030 = vpop.permute.xlu0 %1029
          %v1031 = vunpack.c.l.b16 %v1023
          %v1032 = vunpack.c.h.b16 %v1023
          %v1033 = vunpack.c.l.b16 %v1026
          %v1034 = vunpack.c.h.b16 %v1026
          %v1035 = vunpack.c.l.b16 %v1028
          %v1036 = vunpack.c.h.b16 %v1028
          %v1037 = vunpack.c.l.b16 %v1030
          %v1038 = vunpack.c.h.b16 %v1030
          %v1039 = vpack.c.b16 %v1031, %v1031
          %v1040 = vpack.c.b16 %v1032, %v1032
          %v1041 = vpack.c.b16 %v1033, %v1033
          %v1042 = vpack.c.b16 %v1034, %v1034
          %v1043 = vpack.c.b16 %v1035, %v1035
          %v1044 = vpack.c.b16 %v1036, %v1036
          %v1045 = vpack.c.b16 %v1037, %v1037
          %v1046 = vpack.c.b16 %v1038, %v1038
          %1055 = vst.msk [vmem:[#allocation4] sm:$0xf] %vm974, %v1039
          %1056 = vst.msk [vmem:[#allocation4 + $0x4] sm:$0xf] %vm974, %v1040
          %1057 = vst.msk [vmem:[#allocation4 + $0x8] sm:$0xf] %vm974, %v1041
          %1058 = vst.msk [vmem:[#allocation4 + $0xc] sm:$0xf] %vm974, %v1042
          %1059 = vst.msk [vmem:[#allocation4 + $0x10] sm:$0xf] %vm974, %v1043
          %1060 = vst.msk [vmem:[#allocation4 + $0x14] sm:$0xf] %vm974, %v1044
          %1061 = vst.msk [vmem:[#allocation4 + $0x18] sm:$0xf] %vm974, %v1045
          %1062 = vst.msk [vmem:[#allocation4 + $0x1c] sm:$0xf] %vm974, %v1046
        $region116: #{tpu_custom_call.1} parent=83 // pred_fallthru
          _
        %s1063 = smul.u32 %s43, 8
        %s1064 = scalar_lea.vmem %s583, %s1063 [#allocation5]
        %v1065 = vld [vmem:[%s1064] sm:$0xff]
        %s1066 = sshra.s32 %s1063, 3
        %s1067 = sand.u32 %s1063, 7
        %s1068 = smul.addr %s1066, 4
        %s1069 = scalar_lea.vmem [#allocation2], %s1068
        %v1070 = vld [vmem:[%s1069] sm:$0xf]
        %v1071 = vld [vmem:[%s1069 + $0x8] sm:$0xf]
        %v1072 = vld [vmem:[%s1069 + $0x10] sm:$0xf]
        %v1073 = vld [vmem:[%s1069 + $0x18] sm:$0xf]
        %v1074 = vld [vmem:[#allocation3] sm:$0xf]
        %v1075 = vld [vmem:[#allocation3 + $0x4] sm:$0xf]
        %v1076 = vld [vmem:[#allocation3 + $0x8] sm:$0xf]
        %v1077 = vld [vmem:[#allocation3 + $0xc] sm:$0xf]
        %v1078 = vld [vmem:[#allocation3 + $0x10] sm:$0xf]
        %v1079 = vld [vmem:[#allocation3 + $0x14] sm:$0xf]
        %v1080 = vld [vmem:[#allocation3 + $0x18] sm:$0xf]
        %v1081 = vld [vmem:[#allocation3 + $0x1c] sm:$0xf]
        %v1084 = vunpack.c.l.b16 %v1074
        %v1085 = vunpack.c.l.b16 %v1075
        %v1086 = vpack.c.b16 %v1085, %v1084
        %vm1087 = vcmask 261120
        %v1089 = vsel %vm1087, %v1070, 0
        %v1092 = vsel %vm1087, %v1086, 0
        %1094 = vmatprep.subr.bf16.mxu0 0
        %1095 = vmatpush1.bf16.xpose.msra.mxu0 0
        %1096 = vmatprep.subr.bf16.mxu0 0
        %1097 = vmatpush1.bf16.xpose.msra.mxu0 0
        %1098 = vmatprep.subr.bf16.mxu0 0
        %1099 = vmatpush1.bf16.xpose.msra.mxu0 0
        %1100 = vmatprep.subr.bf16.mxu0 0
        %1101 = vmatpush1.bf16.xpose.msra.mxu0 0
        %1102 = vmatprep.subr.bf16.mxu0 0
        %1103 = vmatpush1.bf16.xpose.msra.mxu0 0
        %1104 = vmatprep.subr.bf16.mxu0 0
        %1105 = vmatpush1.bf16.xpose.msra.mxu0 0
        %1106 = vmatprep.subr.bf16.mxu0 0
        %1107 = vmatpush1.bf16.xpose.msra.mxu0 0
        %1108 = vmatprep.subr.bf16.mxu0 0
        %1109 = vmatpush1.bf16.xpose.msra.mxu0 %v1092
        %1110 = vmatprep.subr.bf16.mxu0 0
        %1111 = vmatpush2.bf16.xpose.msra.mxu0 0
        %1112 = vmatprep.subr.bf16.mxu0 0
        %1113 = vmatpush2.bf16.xpose.msra.mxu0 0
        %1114 = vmatprep.subr.bf16.mxu0 0
        %1115 = vmatpush2.bf16.xpose.msra.mxu0 0
        %1116 = vmatprep.subr.bf16.mxu0 0
        %1117 = vmatpush2.bf16.xpose.msra.mxu0 0
        %1118 = vmatprep.subr.bf16.mxu0 0
        %1119 = vmatpush2.bf16.xpose.msra.mxu0 0
        %1120 = vmatprep.subr.bf16.mxu0 0
        %1121 = vmatpush2.bf16.xpose.msra.mxu0 0
        %1122 = vmatprep.subr.bf16.mxu0 0
        %1123 = vmatpush2.bf16.xpose.msra.mxu0 0
        %1124 = vmatprep.subr.bf16.mxu0 0
        %1125 = vmatpush2.bf16.xpose.msra.mxu0 0
        %1126 = vmatprep.mubr.bf16.mxu0 0
        %1127 = vmatmul.mubr.bf16.gmra.mxu0 %v1089
        %v1128 = vpop.f32.mrf.mxu0
        %v1129 = vadd.f32 0.0, %v1128
        %v1130 = vpop.f32.mrf.mxu0
        %v1131 = vpop.f32.mrf.mxu0
        %v1132 = vpop.f32.mrf.mxu0
        %1133 = vdwg.mxu0
        %v1136 = vunpack.c.l.b16 %v1076
        %v1137 = vunpack.c.l.b16 %v1077
        %v1138 = vpack.c.b16 %v1137, %v1136
        %v1140 = vsel %vm1087, %v1071, 0
        %v1143 = vsel %vm1087, %v1138, 0
        %1145 = vmatprep.subr.bf16.mxu0 0
        %1146 = vmatpush1.bf16.xpose.msra.mxu0 0
        %1147 = vmatprep.subr.bf16.mxu0 0
        %1148 = vmatpush1.bf16.xpose.msra.mxu0 0
        %1149 = vmatprep.subr.bf16.mxu0 0
        %1150 = vmatpush1.bf16.xpose.msra.mxu0 0
        %1151 = vmatprep.subr.bf16.mxu0 0
        %1152 = vmatpush1.bf16.xpose.msra.mxu0 0
        %1153 = vmatprep.subr.bf16.mxu0 0
        %1154 = vmatpush1.bf16.xpose.msra.mxu0 0
        %1155 = vmatprep.subr.bf16.mxu0 0
        %1156 = vmatpush1.bf16.xpose.msra.mxu0 0
        %1157 = vmatprep.subr.bf16.mxu0 0
        %1158 = vmatpush1.bf16.xpose.msra.mxu0 0
        %1159 = vmatprep.subr.bf16.mxu0 0
        %1160 = vmatpush1.bf16.xpose.msra.mxu0 %v1143
        %1161 = vmatprep.subr.bf16.mxu0 0
        %1162 = vmatpush2.bf16.xpose.msra.mxu0 0
        %1163 = vmatprep.subr.bf16.mxu0 0
        %1164 = vmatpush2.bf16.xpose.msra.mxu0 0
        %1165 = vmatprep.subr.bf16.mxu0 0
        %1166 = vmatpush2.bf16.xpose.msra.mxu0 0
        %1167 = vmatprep.subr.bf16.mxu0 0
        %1168 = vmatpush2.bf16.xpose.msra.mxu0 0
        %1169 = vmatprep.subr.bf16.mxu0 0
        %1170 = vmatpush2.bf16.xpose.msra.mxu0 0
        %1171 = vmatprep.subr.bf16.mxu0 0
        %1172 = vmatpush2.bf16.xpose.msra.mxu0 0
        %1173 = vmatprep.subr.bf16.mxu0 0
        %1174 = vmatpush2.bf16.xpose.msra.mxu0 0
        %1175 = vmatprep.subr.bf16.mxu0 0
        %1176 = vmatpush2.bf16.xpose.msra.mxu0 0
        %1177 = vmatprep.mubr.bf16.mxu0 0
        %1178 = vmatmul.mubr.bf16.gmra.mxu0 %v1140
        %v1179 = vpop.f32.mrf.mxu0
        %v1180 = vadd.f32 0.0, %v1179
        %v1181 = vpop.f32.mrf.mxu0
        %v1182 = vpop.f32.mrf.mxu0
        %v1183 = vpop.f32.mrf.mxu0
        %1184 = vdwg.mxu0
        %v1187 = vunpack.c.l.b16 %v1078
        %v1188 = vunpack.c.l.b16 %v1079
        %v1189 = vpack.c.b16 %v1188, %v1187
        %v1191 = vsel %vm1087, %v1072, 0
        %v1194 = vsel %vm1087, %v1189, 0
        %1196 = vmatprep.subr.bf16.mxu0 0
        %1197 = vmatpush1.bf16.xpose.msra.mxu0 0
        %1198 = vmatprep.subr.bf16.mxu0 0
        %1199 = vmatpush1.bf16.xpose.msra.mxu0 0
        %1200 = vmatprep.subr.bf16.mxu0 0
        %1201 = vmatpush1.bf16.xpose.msra.mxu0 0
        %1202 = vmatprep.subr.bf16.mxu0 0
        %1203 = vmatpush1.bf16.xpose.msra.mxu0 0
        %1204 = vmatprep.subr.bf16.mxu0 0
        %1205 = vmatpush1.bf16.xpose.msra.mxu0 0
        %1206 = vmatprep.subr.bf16.mxu0 0
        %1207 = vmatpush1.bf16.xpose.msra.mxu0 0
        %1208 = vmatprep.subr.bf16.mxu0 0
        %1209 = vmatpush1.bf16.xpose.msra.mxu0 0
        %1210 = vmatprep.subr.bf16.mxu0 0
        %1211 = vmatpush1.bf16.xpose.msra.mxu0 %v1194
        %1212 = vmatprep.subr.bf16.mxu0 0
        %1213 = vmatpush2.bf16.xpose.msra.mxu0 0
        %1214 = vmatprep.subr.bf16.mxu0 0
        %1215 = vmatpush2.bf16.xpose.msra.mxu0 0
        %1216 = vmatprep.subr.bf16.mxu0 0
        %1217 = vmatpush2.bf16.xpose.msra.mxu0 0
        %1218 = vmatprep.subr.bf16.mxu0 0
        %1219 = vmatpush2.bf16.xpose.msra.mxu0 0
        %1220 = vmatprep.subr.bf16.mxu0 0
        %1221 = vmatpush2.bf16.xpose.msra.mxu0 0
        %1222 = vmatprep.subr.bf16.mxu0 0
        %1223 = vmatpush2.bf16.xpose.msra.mxu0 0
        %1224 = vmatprep.subr.bf16.mxu0 0
        %1225 = vmatpush2.bf16.xpose.msra.mxu0 0
        %1226 = vmatprep.subr.bf16.mxu0 0
        %1227 = vmatpush2.bf16.xpose.msra.mxu0 0
        %1228 = vmatprep.mubr.bf16.mxu0 0
        %1229 = vmatmul.mubr.bf16.gmra.mxu0 %v1191
        %v1230 = vpop.f32.mrf.mxu0
        %v1231 = vadd.f32 0.0, %v1230
        %v1232 = vpop.f32.mrf.mxu0
        %v1233 = vpop.f32.mrf.mxu0
        %v1234 = vpop.f32.mrf.mxu0
        %1235 = vdwg.mxu0
        %v1238 = vunpack.c.l.b16 %v1080
        %v1239 = vunpack.c.l.b16 %v1081
        %v1240 = vpack.c.b16 %v1239, %v1238
        %v1242 = vsel %vm1087, %v1073, 0
        %v1245 = vsel %vm1087, %v1240, 0
        %1247 = vmatprep.subr.bf16.mxu0 0
        %1248 = vmatpush1.bf16.xpose.msra.mxu0 0
        %1249 = vmatprep.subr.bf16.mxu0 0
        %1250 = vmatpush1.bf16.xpose.msra.mxu0 0
        %1251 = vmatprep.subr.bf16.mxu0 0
        %1252 = vmatpush1.bf16.xpose.msra.mxu0 0
        %1253 = vmatprep.subr.bf16.mxu0 0
        %1254 = vmatpush1.bf16.xpose.msra.mxu0 0
        %1255 = vmatprep.subr.bf16.mxu0 0
        %1256 = vmatpush1.bf16.xpose.msra.mxu0 0
        %1257 = vmatprep.subr.bf16.mxu0 0
        %1258 = vmatpush1.bf16.xpose.msra.mxu0 0
        %1259 = vmatprep.subr.bf16.mxu0 0
        %1260 = vmatpush1.bf16.xpose.msra.mxu0 0
        %1261 = vmatprep.subr.bf16.mxu0 0
        %1262 = vmatpush1.bf16.xpose.msra.mxu0 %v1245
        %1263 = vmatprep.subr.bf16.mxu0 0
        %1264 = vmatpush2.bf16.xpose.msra.mxu0 0
        %1265 = vmatprep.subr.bf16.mxu0 0
        %1266 = vmatpush2.bf16.xpose.msra.mxu0 0
        %1267 = vmatprep.subr.bf16.mxu0 0
        %1268 = vmatpush2.bf16.xpose.msra.mxu0 0
        %1269 = vmatprep.subr.bf16.mxu0 0
        %1270 = vmatpush2.bf16.xpose.msra.mxu0 0
        %1271 = vmatprep.subr.bf16.mxu0 0
        %1272 = vmatpush2.bf16.xpose.msra.mxu0 0
        %1273 = vmatprep.subr.bf16.mxu0 0
        %1274 = vmatpush2.bf16.xpose.msra.mxu0 0
        %1275 = vmatprep.subr.bf16.mxu0 0
        %1276 = vmatpush2.bf16.xpose.msra.mxu0 0
        %1277 = vmatprep.subr.bf16.mxu0 0
        %1278 = vmatpush2.bf16.xpose.msra.mxu0 0
        %1279 = vmatprep.mubr.bf16.mxu0 0
        %1280 = vmatmul.mubr.bf16.gmra.mxu0 %v1242
        %v1281 = vpop.f32.mrf.mxu0
        %v1282 = vadd.f32 0.0, %v1281
        %v1283 = vpop.f32.mrf.mxu0
        %v1284 = vpop.f32.mrf.mxu0
        %v1285 = vpop.f32.mrf.mxu0
        %1286 = vdwg.mxu0
        %vm1287 = vcmask 130048
        %v1288 = vsel %vm1287, %v1129, -inf
        %1289 = vmax.xlane.f32.xlu0 %v1288
        %v1290 = vpop.xlane.xlu0 %1289
        %v1291 = vsel %vm1287, %v1180, -inf
        %1292 = vmax.xlane.f32.xlu0 %v1291
        %v1293 = vpop.xlane.xlu0 %1292
        %v1294 = vsel %vm1287, %v1231, -inf
        %1295 = vmax.xlane.f32.xlu0 %v1294
        %v1296 = vpop.xlane.xlu0 %1295
        %v1297 = vsel %vm1287, %v1282, -inf
        %1298 = vmax.xlane.f32.xlu0 %v1297
        %v1299 = vpop.xlane.xlu0 %1298
        %v1300 = vsub.f32 %v1129, %v1290
        %v1301 = vsub.f32 %v1180, %v1293
        %v1302 = vsub.f32 %v1231, %v1296
        %v1303 = vsub.f32 %v1282, %v1299
        %v1304 = vmul.f32 %v1300, 1.442695
        %v1305 = vpow.pop %v1304
        %v1306 = vmul.f32 %v1301, 1.442695
        %v1307 = vpow.pop %v1306
        %v1308 = vmul.f32 %v1302, 1.442695
        %v1309 = vpow.pop %v1308
        %v1310 = vmul.f32 %v1303, 1.442695
        %v1311 = vpow.pop %v1310
        %v1312 = vsel %vm1287, %v1305, 0.0
        %1313 = vadd.xlane.f32.xlu0 %v1312
        %v1314 = vpop.xlane.xlu0 %1313
        %v1315 = vsel %vm1287, %v1307, 0.0
        %1316 = vadd.xlane.f32.xlu0 %v1315
        %v1317 = vpop.xlane.xlu0 %1316
        %v1318 = vsel %vm1287, %v1309, 0.0
        %1319 = vadd.xlane.f32.xlu0 %v1318
        %v1320 = vpop.xlane.xlu0 %1319
        %v1321 = vsel %vm1287, %v1311, 0.0
        %1322 = vadd.xlane.f32.xlu0 %v1321
        %v1323 = vpop.xlane.xlu0 %1322
        %v1324 = vrcp.pop %v1314
        %v1325 = vrcp.pop %v1317
        %v1326 = vrcp.pop %v1320
        %v1327 = vrcp.pop %v1323
        %v1328 = vmul.f32 %v1305, %v1324
        %v1329 = vmul.f32 %v1307, %v1325
        %v1330 = vmul.f32 %v1309, %v1326
        %v1331 = vmul.f32 %v1311, %v1327
        %v1332 = vpack.c.bf16 %v1328, %v1328
        %v1333 = vpack.c.bf16 %v1329, %v1329
        %v1334 = vpack.c.bf16 %v1330, %v1330
        %v1335 = vpack.c.bf16 %v1331, %v1331
        %v1336 = vld [vmem:[#allocation4] sm:$0xf]
        %v1337 = vld [vmem:[#allocation4 + $0x4] sm:$0xf]
        %v1338 = vld [vmem:[#allocation4 + $0x8] sm:$0xf]
        %v1339 = vld [vmem:[#allocation4 + $0xc] sm:$0xf]
        %v1340 = vld [vmem:[#allocation4 + $0x10] sm:$0xf]
        %v1341 = vld [vmem:[#allocation4 + $0x14] sm:$0xf]
        %v1342 = vld [vmem:[#allocation4 + $0x18] sm:$0xf]
        %v1343 = vld [vmem:[#allocation4 + $0x1c] sm:$0xf]
        %v1346 = vunpack.c.l.b16 %v1336
        %v1347 = vunpack.c.l.b16 %v1337
        %v1348 = vpack.c.b16 %v1347, %v1346
        %v1351 = vsel %vm1287, %v1332, 0
        %1353 = vmatprep.subr.bf16.mxu0 0
        %1354 = vmatpush1.bf16.msra.mxu0 0
        %1355 = vmatprep.subr.bf16.mxu0 0
        %1356 = vmatpush1.bf16.msra.mxu0 0
        %1357 = vmatprep.subr.bf16.mxu0 0
        %1358 = vmatpush1.bf16.msra.mxu0 0
        %1359 = vmatprep.subr.bf16.mxu0 0
        %1360 = vmatpush1.bf16.msra.mxu0 0
        %1361 = vmatprep.subr.bf16.mxu0 0
        %1362 = vmatpush1.bf16.msra.mxu0 0
        %1363 = vmatprep.subr.bf16.mxu0 0
        %1364 = vmatpush1.bf16.msra.mxu0 0
        %1365 = vmatprep.subr.bf16.mxu0 0
        %1366 = vmatpush1.bf16.msra.mxu0 0
        %1367 = vmatprep.subr.bf16.mxu0 0
        %1368 = vmatpush1.bf16.msra.mxu0 %v1348
        %1369 = vmatprep.subr.bf16.mxu0 0
        %1370 = vmatpush2.bf16.msra.mxu0 0
        %1371 = vmatprep.subr.bf16.mxu0 0
        %1372 = vmatpush2.bf16.msra.mxu0 0
        %1373 = vmatprep.subr.bf16.mxu0 0
        %1374 = vmatpush2.bf16.msra.mxu0 0
        %1375 = vmatprep.subr.bf16.mxu0 0
        %1376 = vmatpush2.bf16.msra.mxu0 0
        %1377 = vmatprep.subr.bf16.mxu0 0
        %1378 = vmatpush2.bf16.msra.mxu0 0
        %1379 = vmatprep.subr.bf16.mxu0 0
        %1380 = vmatpush2.bf16.msra.mxu0 0
        %1381 = vmatprep.subr.bf16.mxu0 0
        %1382 = vmatpush2.bf16.msra.mxu0 0
        %1383 = vmatprep.subr.bf16.mxu0 0
        %1384 = vmatpush2.bf16.msra.mxu0 0
        %1385 = vmatprep.mubr.bf16.mxu0 0
        %1386 = vmatmul.mubr.bf16.gmra.mxu0 %v1351
        %v1387 = vpop.f32.mrf.mxu0
        %v1388 = vadd.f32 0.0, %v1387
        %v1389 = vpop.f32.mrf.mxu0
        %v1390 = vpop.f32.mrf.mxu0
        %v1391 = vpop.f32.mrf.mxu0
        %1392 = vdwg.mxu0
        %v1395 = vunpack.c.l.b16 %v1338
        %v1396 = vunpack.c.l.b16 %v1339
        %v1397 = vpack.c.b16 %v1396, %v1395
        %v1400 = vsel %vm1287, %v1333, 0
        %1402 = vmatprep.subr.bf16.mxu0 0
        %1403 = vmatpush1.bf16.msra.mxu0 0
        %1404 = vmatprep.subr.bf16.mxu0 0
        %1405 = vmatpush1.bf16.msra.mxu0 0
        %1406 = vmatprep.subr.bf16.mxu0 0
        %1407 = vmatpush1.bf16.msra.mxu0 0
        %1408 = vmatprep.subr.bf16.mxu0 0
        %1409 = vmatpush1.bf16.msra.mxu0 0
        %1410 = vmatprep.subr.bf16.mxu0 0
        %1411 = vmatpush1.bf16.msra.mxu0 0
        %1412 = vmatprep.subr.bf16.mxu0 0
        %1413 = vmatpush1.bf16.msra.mxu0 0
        %1414 = vmatprep.subr.bf16.mxu0 0
        %1415 = vmatpush1.bf16.msra.mxu0 0
        %1416 = vmatprep.subr.bf16.mxu0 0
        %1417 = vmatpush1.bf16.msra.mxu0 %v1397
        %1418 = vmatprep.subr.bf16.mxu0 0
        %1419 = vmatpush2.bf16.msra.mxu0 0
        %1420 = vmatprep.subr.bf16.mxu0 0
        %1421 = vmatpush2.bf16.msra.mxu0 0
        %1422 = vmatprep.subr.bf16.mxu0 0
        %1423 = vmatpush2.bf16.msra.mxu0 0
        %1424 = vmatprep.subr.bf16.mxu0 0
        %1425 = vmatpush2.bf16.msra.mxu0 0
        %1426 = vmatprep.subr.bf16.mxu0 0
        %1427 = vmatpush2.bf16.msra.mxu0 0
        %1428 = vmatprep.subr.bf16.mxu0 0
        %1429 = vmatpush2.bf16.msra.mxu0 0
        %1430 = vmatprep.subr.bf16.mxu0 0
        %1431 = vmatpush2.bf16.msra.mxu0 0
        %1432 = vmatprep.subr.bf16.mxu0 0
        %1433 = vmatpush2.bf16.msra.mxu0 0
        %1434 = vmatprep.mubr.bf16.mxu0 0
        %1435 = vmatmul.mubr.bf16.gmra.mxu0 %v1400
        %v1436 = vpop.f32.mrf.mxu0
        %v1437 = vadd.f32 0.0, %v1436
        %v1438 = vpop.f32.mrf.mxu0
        %v1439 = vpop.f32.mrf.mxu0
        %v1440 = vpop.f32.mrf.mxu0
        %1441 = vdwg.mxu0
        %v1444 = vunpack.c.l.b16 %v1340
        %v1445 = vunpack.c.l.b16 %v1341
        %v1446 = vpack.c.b16 %v1445, %v1444
        %v1449 = vsel %vm1287, %v1334, 0
        %1451 = vmatprep.subr.bf16.mxu0 0
        %1452 = vmatpush1.bf16.msra.mxu0 0
        %1453 = vmatprep.subr.bf16.mxu0 0
        %1454 = vmatpush1.bf16.msra.mxu0 0
        %1455 = vmatprep.subr.bf16.mxu0 0
        %1456 = vmatpush1.bf16.msra.mxu0 0
        %1457 = vmatprep.subr.bf16.mxu0 0
        %1458 = vmatpush1.bf16.msra.mxu0 0
        %1459 = vmatprep.subr.bf16.mxu0 0
        %1460 = vmatpush1.bf16.msra.mxu0 0
        %1461 = vmatprep.subr.bf16.mxu0 0
        %1462 = vmatpush1.bf16.msra.mxu0 0
        %1463 = vmatprep.subr.bf16.mxu0 0
        %1464 = vmatpush1.bf16.msra.mxu0 0
        %1465 = vmatprep.subr.bf16.mxu0 0
        %1466 = vmatpush1.bf16.msra.mxu0 %v1446
        %1467 = vmatprep.subr.bf16.mxu0 0
        %1468 = vmatpush2.bf16.msra.mxu0 0
        %1469 = vmatprep.subr.bf16.mxu0 0
        %1470 = vmatpush2.bf16.msra.mxu0 0
        %1471 = vmatprep.subr.bf16.mxu0 0
        %1472 = vmatpush2.bf16.msra.mxu0 0
        %1473 = vmatprep.subr.bf16.mxu0 0
        %1474 = vmatpush2.bf16.msra.mxu0 0
        %1475 = vmatprep.subr.bf16.mxu0 0
        %1476 = vmatpush2.bf16.msra.mxu0 0
        %1477 = vmatprep.subr.bf16.mxu0 0
        %1478 = vmatpush2.bf16.msra.mxu0 0
        %1479 = vmatprep.subr.bf16.mxu0 0
        %1480 = vmatpush2.bf16.msra.mxu0 0
        %1481 = vmatprep.subr.bf16.mxu0 0
        %1482 = vmatpush2.bf16.msra.mxu0 0
        %1483 = vmatprep.mubr.bf16.mxu0 0
        %1484 = vmatmul.mubr.bf16.gmra.mxu0 %v1449
        %v1485 = vpop.f32.mrf.mxu0
        %v1486 = vadd.f32 0.0, %v1485
        %v1487 = vpop.f32.mrf.mxu0
        %v1488 = vpop.f32.mrf.mxu0
        %v1489 = vpop.f32.mrf.mxu0
        %1490 = vdwg.mxu0
        %v1493 = vunpack.c.l.b16 %v1342
        %v1494 = vunpack.c.l.b16 %v1343
        %v1495 = vpack.c.b16 %v1494, %v1493
        %v1498 = vsel %vm1287, %v1335, 0
        %1500 = vmatprep.subr.bf16.mxu0 0
        %1501 = vmatpush1.bf16.msra.mxu0 0
        %1502 = vmatprep.subr.bf16.mxu0 0
        %1503 = vmatpush1.bf16.msra.mxu0 0
        %1504 = vmatprep.subr.bf16.mxu0 0
        %1505 = vmatpush1.bf16.msra.mxu0 0
        %1506 = vmatprep.subr.bf16.mxu0 0
        %1507 = vmatpush1.bf16.msra.mxu0 0
        %1508 = vmatprep.subr.bf16.mxu0 0
        %1509 = vmatpush1.bf16.msra.mxu0 0
        %1510 = vmatprep.subr.bf16.mxu0 0
        %1511 = vmatpush1.bf16.msra.mxu0 0
        %1512 = vmatprep.subr.bf16.mxu0 0
        %1513 = vmatpush1.bf16.msra.mxu0 0
        %1514 = vmatprep.subr.bf16.mxu0 0
        %1515 = vmatpush1.bf16.msra.mxu0 %v1495
        %1516 = vmatprep.subr.bf16.mxu0 0
        %1517 = vmatpush2.bf16.msra.mxu0 0
        %1518 = vmatprep.subr.bf16.mxu0 0
        %1519 = vmatpush2.bf16.msra.mxu0 0
        %1520 = vmatprep.subr.bf16.mxu0 0
        %1521 = vmatpush2.bf16.msra.mxu0 0
        %1522 = vmatprep.subr.bf16.mxu0 0
        %1523 = vmatpush2.bf16.msra.mxu0 0
        %1524 = vmatprep.subr.bf16.mxu0 0
        %1525 = vmatpush2.bf16.msra.mxu0 0
        %1526 = vmatprep.subr.bf16.mxu0 0
        %1527 = vmatpush2.bf16.msra.mxu0 0
        %1528 = vmatprep.subr.bf16.mxu0 0
        %1529 = vmatpush2.bf16.msra.mxu0 0
        %1530 = vmatprep.subr.bf16.mxu0 0
        %1531 = vmatpush2.bf16.msra.mxu0 0
        %1532 = vmatprep.mubr.bf16.mxu0 0
        %1533 = vmatmul.mubr.bf16.gmra.mxu0 %v1498
        %v1534 = vpop.f32.mrf.mxu0
        %v1535 = vadd.f32 0.0, %v1534
        %v1536 = vpop.f32.mrf.mxu0
        %v1537 = vpop.f32.mrf.mxu0
        %v1538 = vpop.f32.mrf.mxu0
        %1539 = vdwg.mxu0
        %v1540 = vpack.c.bf16 %v1388, %v1388
        %v1541 = vpack.c.bf16 %v1437, %v1437
        %v1542 = vpack.c.bf16 %v1486, %v1486
        %v1543 = vpack.c.bf16 %v1535, %v1535
        %1545 = vrot.lane.b32.xlu0 %v1541, 32
        %v1546 = vpop.permute.xlu0 %1545
        %1548 = vrot.lane.b32.xlu0 %v1542, 64
        %v1549 = vpop.permute.xlu0 %1548
        %1551 = vrot.lane.b32.xlu0 %v1543, 96
        %v1552 = vpop.permute.xlu0 %1551
        %v1555 = vsel %vm1087, %v1540, %v1546
        %vm1556 = vcmask 523264
        %v1558 = vsel %vm1556, %v1555, %v1549
        %vm1559 = vcmask 785408
        %v1561 = vsel %vm1559, %v1558, %v1552
        %v1563 = vld [vmem:[#allocation13] sm:$0xf]
        %v1564 = vld [vmem:[#allocation13 + $0x4] sm:$0xf]
        %v1565 = vld [vmem:[#allocation13 + $0x8] sm:$0xf]
        %v1566 = vld [vmem:[#allocation13 + $0xc] sm:$0xf]
        %v1567 = vld [vmem:[#allocation13 + $0x10] sm:$0xf]
        %v1568 = vld [vmem:[#allocation13 + $0x14] sm:$0xf]
        %v1569 = vld [vmem:[#allocation13 + $0x18] sm:$0xf]
        %v1570 = vld [vmem:[#allocation13 + $0x1c] sm:$0xf]
        %v1571 = vld [vmem:[#allocation13 + $0x20] sm:$0xf]
        %v1572 = vld [vmem:[#allocation13 + $0x24] sm:$0xf]
        %v1573 = vld [vmem:[#allocation13 + $0x28] sm:$0xf]
        %v1574 = vld [vmem:[#allocation13 + $0x2c] sm:$0xf]
        %v1575 = vld [vmem:[#allocation13 + $0x30] sm:$0xf]
        %v1576 = vld [vmem:[#allocation13 + $0x34] sm:$0xf]
        %v1577 = vld [vmem:[#allocation13 + $0x38] sm:$0xf]
        %v1578 = vld [vmem:[#allocation13 + $0x3c] sm:$0xf]
        %v1579 = vld [vmem:[%s7] sm:$0x1]
        %v1581 = vlaneseq
        %v1582 = vshrl.u32 %v1581, 7
        %v1583 = vsub.s32 0, %v1582
        %v1584 = vrot.slane %v1579, %v1583
        %v1602 = vunpack.c.l.b16 %v1563
        %v1603 = vunpack.c.l.b16 %v1564
        %v1604 = vunpack.c.l.b16 %v1565
        %v1605 = vunpack.c.l.b16 %v1566
        %v1606 = vunpack.c.l.b16 %v1567
        %v1607 = vunpack.c.l.b16 %v1568
        %v1608 = vunpack.c.l.b16 %v1569
        %v1609 = vunpack.c.l.b16 %v1570
        %v1610 = vunpack.c.l.b16 %v1571
        %v1611 = vunpack.c.l.b16 %v1572
        %v1612 = vunpack.c.l.b16 %v1573
        %v1613 = vunpack.c.l.b16 %v1574
        %v1614 = vunpack.c.l.b16 %v1575
        %v1615 = vunpack.c.l.b16 %v1576
        %v1616 = vunpack.c.l.b16 %v1577
        %v1617 = vunpack.c.l.b16 %v1578
        %v1618 = vpack.c.b16 %v1603, %v1602
        %v1619 = vpack.c.b16 %v1605, %v1604
        %v1620 = vpack.c.b16 %v1607, %v1606
        %v1621 = vpack.c.b16 %v1609, %v1608
        %v1622 = vpack.c.b16 %v1611, %v1610
        %v1623 = vpack.c.b16 %v1613, %v1612
        %v1624 = vpack.c.b16 %v1615, %v1614
        %v1625 = vpack.c.b16 %v1617, %v1616
        %1634 = vmatprep.subr.bf16.mxu0 0
        %1635 = vmatpush1.bf16.msra.mxu0 %v1625
        %1636 = vmatprep.subr.bf16.mxu0 0
        %1637 = vmatpush1.bf16.msra.mxu0 %v1624
        %1638 = vmatprep.subr.bf16.mxu0 0
        %1639 = vmatpush1.bf16.msra.mxu0 %v1623
        %1640 = vmatprep.subr.bf16.mxu0 0
        %1641 = vmatpush1.bf16.msra.mxu0 %v1622
        %1642 = vmatprep.subr.bf16.mxu0 0
        %1643 = vmatpush1.bf16.msra.mxu0 %v1621
        %1644 = vmatprep.subr.bf16.mxu0 0
        %1645 = vmatpush1.bf16.msra.mxu0 %v1620
        %1646 = vmatprep.subr.bf16.mxu0 0
        %1647 = vmatpush1.bf16.msra.mxu0 %v1619
        %1648 = vmatprep.subr.bf16.mxu0 0
        %1649 = vmatpush1.bf16.msra.mxu0 %v1618
        %1650 = vmatprep.subr.bf16.mxu0 0
        %1651 = vmatpush2.bf16.msra.mxu0 0
        %1652 = vmatprep.subr.bf16.mxu0 0
        %1653 = vmatpush2.bf16.msra.mxu0 0
        %1654 = vmatprep.subr.bf16.mxu0 0
        %1655 = vmatpush2.bf16.msra.mxu0 0
        %1656 = vmatprep.subr.bf16.mxu0 0
        %1657 = vmatpush2.bf16.msra.mxu0 0
        %1658 = vmatprep.subr.bf16.mxu0 0
        %1659 = vmatpush2.bf16.msra.mxu0 0
        %1660 = vmatprep.subr.bf16.mxu0 0
        %1661 = vmatpush2.bf16.msra.mxu0 0
        %1662 = vmatprep.subr.bf16.mxu0 0
        %1663 = vmatpush2.bf16.msra.mxu0 0
        %1664 = vmatprep.subr.bf16.mxu0 0
        %1665 = vmatpush2.bf16.msra.mxu0 0
        %1666 = vmatprep.mubr.bf16.mxu0 0
        %1667 = vmatmul.mubr.bf16.gmra.mxu0 %v1561
        %v1668 = vpop.f32.mrf.mxu0
        %v1669 = vadd.f32 %v1584, %v1668
        %v1670 = vpop.f32.mrf.mxu0
        %v1671 = vpop.f32.mrf.mxu0
        %v1672 = vpop.f32.mrf.mxu0
        %1673 = vdwg.mxu0
        %v1674 = vadd.f32 %v1065, %v1669
        %v1675 = vld [vmem:[%s12] sm:$0x1]
        %v1676 = vld [vmem:[%s13] sm:$0x1]
        %1677 = vadd.xlane.f32.xlu0 %v1674
        %v1678 = vpop.xlane.xlu0 %1677
        %v1679 = vrcp.pop 128.0
        %v1680 = vmul.f32 %v1678, %v1679
        %v1681 = vsub.f32 %v1674, %v1680
        %v1682 = vmul.f32 %v1681, %v1681
        %1683 = vadd.xlane.f32.xlu0 %v1682
        %v1684 = vpop.xlane.xlu0 %1683
        %v1685 = vmul.f32 %v1684, %v1679
        %v1686 = vadd.f32 %v1685, 1e-05
        %v1687 = vrsqrt.pop %v1686
        %v1688 = vmul.f32 %v1681, %v1687
        %v1690 = vlaneseq
        %v1691 = vshrl.u32 %v1690, 7
        %v1692 = vsub.s32 0, %v1691
        %v1693 = vrot.slane %v1675, %v1692
        %v1695 = vmul.f32 %v1688, %v1693
        %v1697 = vlaneseq
        %v1698 = vshrl.u32 %v1697, 7
        %v1699 = vsub.s32 0, %v1698
        %v1700 = vrot.slane %v1676, %v1699
        %v1702 = vadd.f32 %v1695, %v1700
        %v1703 = vpack.c.bf16 %v1702, %v1702
        %v1704 = vld [vmem:[#allocation14] sm:$0xff]
        %v1705 = vld [vmem:[#allocation14 + $0x8] sm:$0xff]
        %v1706 = vld [vmem:[#allocation14 + $0x10] sm:$0xff]
        %v1707 = vld [vmem:[#allocation14 + $0x18] sm:$0xff]
        %v1708 = vld [vmem:[#allocation14 + $0x20] sm:$0xff]
        %v1709 = vld [vmem:[#allocation14 + $0x28] sm:$0xff]
        %v1710 = vld [vmem:[#allocation14 + $0x30] sm:$0xff]
        %v1711 = vld [vmem:[#allocation14 + $0x38] sm:$0xff]
        %v1712 = vld [vmem:[#allocation14 + $0x40] sm:$0xff]
        %v1713 = vld [vmem:[#allocation14 + $0x48] sm:$0xff]
        %v1714 = vld [vmem:[#allocation14 + $0x50] sm:$0xff]
        %v1715 = vld [vmem:[#allocation14 + $0x58] sm:$0xff]
        %v1716 = vld [vmem:[#allocation14 + $0x60] sm:$0xff]
        %v1717 = vld [vmem:[#allocation14 + $0x68] sm:$0xff]
        %v1718 = vld [vmem:[#allocation14 + $0x70] sm:$0xff]
        %v1719 = vld [vmem:[#allocation14 + $0x78] sm:$0xff]
        %v1720 = vld [vmem:[%s9] sm:$0x3]
        %v1722 = vlaneseq
        %v1723 = vshrl.u32 %v1722, 7
        %v1724 = vsub.s32 0, %v1723
        %v1725 = vrot.slane %v1720, %v1724
        %v1726 = vlaneseq
        %v1727 = vshrl.u32 %v1726, 7
        %v1728 = vsub.s32 1, %v1727
        %v1729 = vrot.slane %v1720, %v1728
        %v1748 = vunpack.c.l.b16 %v1704
        %v1749 = vunpack.c.h.b16 %v1704
        %v1750 = vunpack.c.l.b16 %v1705
        %v1751 = vunpack.c.h.b16 %v1705
        %v1752 = vunpack.c.l.b16 %v1706
        %v1753 = vunpack.c.h.b16 %v1706
        %v1754 = vunpack.c.l.b16 %v1707
        %v1755 = vunpack.c.h.b16 %v1707
        %v1756 = vunpack.c.l.b16 %v1708
        %v1757 = vunpack.c.h.b16 %v1708
        %v1758 = vunpack.c.l.b16 %v1709
        %v1759 = vunpack.c.h.b16 %v1709
        %v1760 = vunpack.c.l.b16 %v1710
        %v1761 = vunpack.c.h.b16 %v1710
        %v1762 = vunpack.c.l.b16 %v1711
        %v1763 = vunpack.c.h.b16 %v1711
        %v1764 = vunpack.c.l.b16 %v1712
        %v1765 = vunpack.c.h.b16 %v1712
        %v1766 = vunpack.c.l.b16 %v1713
        %v1767 = vunpack.c.h.b16 %v1713
        %v1768 = vunpack.c.l.b16 %v1714
        %v1769 = vunpack.c.h.b16 %v1714
        %v1770 = vunpack.c.l.b16 %v1715
        %v1771 = vunpack.c.h.b16 %v1715
        %v1772 = vunpack.c.l.b16 %v1716
        %v1773 = vunpack.c.h.b16 %v1716
        %v1774 = vunpack.c.l.b16 %v1717
        %v1775 = vunpack.c.h.b16 %v1717
        %v1776 = vunpack.c.l.b16 %v1718
        %v1777 = vunpack.c.h.b16 %v1718
        %v1778 = vunpack.c.l.b16 %v1719
        %v1779 = vunpack.c.h.b16 %v1719
        %v1780 = vpack.c.b16 %v1750, %v1748
        %v1781 = vpack.c.b16 %v1751, %v1749
        %v1782 = vpack.c.b16 %v1754, %v1752
        %v1783 = vpack.c.b16 %v1755, %v1753
        %v1784 = vpack.c.b16 %v1758, %v1756
        %v1785 = vpack.c.b16 %v1759, %v1757
        %v1786 = vpack.c.b16 %v1762, %v1760
        %v1787 = vpack.c.b16 %v1763, %v1761
        %v1788 = vpack.c.b16 %v1766, %v1764
        %v1789 = vpack.c.b16 %v1767, %v1765
        %v1790 = vpack.c.b16 %v1770, %v1768
        %v1791 = vpack.c.b16 %v1771, %v1769
        %v1792 = vpack.c.b16 %v1774, %v1772
        %v1793 = vpack.c.b16 %v1775, %v1773
        %v1794 = vpack.c.b16 %v1778, %v1776
        %v1795 = vpack.c.b16 %v1779, %v1777
        %1812 = vmatprep.subr.bf16.mxu0 %v1795
        %1813 = vmatpush1.bf16.msra.mxu0 %v1794
        %1814 = vmatprep.subr.bf16.mxu0 %v1793
        %1815 = vmatpush1.bf16.msra.mxu0 %v1792
        %1816 = vmatprep.subr.bf16.mxu0 %v1791
        %1817 = vmatpush1.bf16.msra.mxu0 %v1790
        %1818 = vmatprep.subr.bf16.mxu0 %v1789
        %1819 = vmatpush1.bf16.msra.mxu0 %v1788
        %1820 = vmatprep.subr.bf16.mxu0 %v1787
        %1821 = vmatpush1.bf16.msra.mxu0 %v1786
        %1822 = vmatprep.subr.bf16.mxu0 %v1785
        %1823 = vmatpush1.bf16.msra.mxu0 %v1784
        %1824 = vmatprep.subr.bf16.mxu0 %v1783
        %1825 = vmatpush1.bf16.msra.mxu0 %v1782
        %1826 = vmatprep.subr.bf16.mxu0 %v1781
        %1827 = vmatpush1.bf16.msra.mxu0 %v1780
        %1828 = vmatprep.subr.bf16.mxu0 0
        %1829 = vmatpush2.bf16.msra.mxu0 0
        %1830 = vmatprep.subr.bf16.mxu0 0
        %1831 = vmatpush2.bf16.msra.mxu0 0
        %1832 = vmatprep.subr.bf16.mxu0 0
        %1833 = vmatpush2.bf16.msra.mxu0 0
        %1834 = vmatprep.subr.bf16.mxu0 0
        %1835 = vmatpush2.bf16.msra.mxu0 0
        %1836 = vmatprep.subr.bf16.mxu0 0
        %1837 = vmatpush2.bf16.msra.mxu0 0
        %1838 = vmatprep.subr.bf16.mxu0 0
        %1839 = vmatpush2.bf16.msra.mxu0 0
        %1840 = vmatprep.subr.bf16.mxu0 0
        %1841 = vmatpush2.bf16.msra.mxu0 0
        %1842 = vmatprep.subr.bf16.mxu0 0
        %1843 = vmatpush2.bf16.msra.mxu0 0
        %1844 = vmatprep.mubr.bf16.mxu0 0
        %1845 = vmatmul.mubr.bf16.gmra.mxu0 %v1703
        %v1846 = vpop.f32.mrf.mxu0
        %v1847 = vadd.f32 %v1725, %v1846
        %v1848 = vpop.f32.mrf.mxu0
        %v1849 = vadd.f32 %v1729, %v1848
        %v1850 = vpop.f32.mrf.mxu0
        %v1851 = vpop.f32.mrf.mxu0
        %1852 = vdwg.mxu0
        %v1853 = vmax.f32 %v1847, 0.0
        %v1854 = vmax.f32 %v1849, 0.0
        %v1855 = vpack.c.bf16 %v1853, %v1853
        %v1856 = vpack.c.bf16 %v1854, %v1854
        %v1857 = vld [vmem:[#allocation16] sm:$0xf]
        %v1858 = vld [vmem:[#allocation16 + $0x4] sm:$0xf]
        %v1859 = vld [vmem:[#allocation16 + $0x8] sm:$0xf]
        %v1860 = vld [vmem:[#allocation16 + $0xc] sm:$0xf]
        %v1861 = vld [vmem:[#allocation16 + $0x10] sm:$0xf]
        %v1862 = vld [vmem:[#allocation16 + $0x14] sm:$0xf]
        %v1863 = vld [vmem:[#allocation16 + $0x18] sm:$0xf]
        %v1864 = vld [vmem:[#allocation16 + $0x1c] sm:$0xf]
        %v1865 = vld [vmem:[#allocation16 + $0x20] sm:$0xf]
        %v1866 = vld [vmem:[#allocation16 + $0x24] sm:$0xf]
        %v1867 = vld [vmem:[#allocation16 + $0x28] sm:$0xf]
        %v1868 = vld [vmem:[#allocation16 + $0x2c] sm:$0xf]
        %v1869 = vld [vmem:[#allocation16 + $0x30] sm:$0xf]
        %v1870 = vld [vmem:[#allocation16 + $0x34] sm:$0xf]
        %v1871 = vld [vmem:[#allocation16 + $0x38] sm:$0xf]
        %v1872 = vld [vmem:[#allocation16 + $0x3c] sm:$0xf]
        %v1873 = vld [vmem:[#allocation16 + $0x40] sm:$0xf]
        %v1874 = vld [vmem:[#allocation16 + $0x44] sm:$0xf]
        %v1875 = vld [vmem:[#allocation16 + $0x48] sm:$0xf]
        %v1876 = vld [vmem:[#allocation16 + $0x4c] sm:$0xf]
        %v1877 = vld [vmem:[#allocation16 + $0x50] sm:$0xf]
        %v1878 = vld [vmem:[#allocation16 + $0x54] sm:$0xf]
        %v1879 = vld [vmem:[#allocation16 + $0x58] sm:$0xf]
        %v1880 = vld [vmem:[#allocation16 + $0x5c] sm:$0xf]
        %v1881 = vld [vmem:[#allocation16 + $0x60] sm:$0xf]
        %v1882 = vld [vmem:[#allocation16 + $0x64] sm:$0xf]
        %v1883 = vld [vmem:[#allocation16 + $0x68] sm:$0xf]
        %v1884 = vld [vmem:[#allocation16 + $0x6c] sm:$0xf]
        %v1885 = vld [vmem:[#allocation16 + $0x70] sm:$0xf]
        %v1886 = vld [vmem:[#allocation16 + $0x74] sm:$0xf]
        %v1887 = vld [vmem:[#allocation16 + $0x78] sm:$0xf]
        %v1888 = vld [vmem:[#allocation16 + $0x7c] sm:$0xf]
        %v1889 = vld [vmem:[%s11] sm:$0x1]
        %v1891 = vlaneseq
        %v1892 = vshrl.u32 %v1891, 7
        %v1893 = vsub.s32 0, %v1892
        %v1894 = vrot.slane %v1889, %v1893
        %v1928 = vunpack.c.l.b16 %v1857
        %v1929 = vunpack.c.l.b16 %v1858
        %v1930 = vunpack.c.l.b16 %v1859
        %v1931 = vunpack.c.l.b16 %v1860
        %v1932 = vunpack.c.l.b16 %v1861
        %v1933 = vunpack.c.l.b16 %v1862
        %v1934 = vunpack.c.l.b16 %v1863
        %v1935 = vunpack.c.l.b16 %v1864
        %v1936 = vunpack.c.l.b16 %v1865
        %v1937 = vunpack.c.l.b16 %v1866
        %v1938 = vunpack.c.l.b16 %v1867
        %v1939 = vunpack.c.l.b16 %v1868
        %v1940 = vunpack.c.l.b16 %v1869
        %v1941 = vunpack.c.l.b16 %v1870
        %v1942 = vunpack.c.l.b16 %v1871
        %v1943 = vunpack.c.l.b16 %v1872
        %v1944 = vunpack.c.l.b16 %v1873
        %v1945 = vunpack.c.l.b16 %v1874
        %v1946 = vunpack.c.l.b16 %v1875
        %v1947 = vunpack.c.l.b16 %v1876
        %v1948 = vunpack.c.l.b16 %v1877
        %v1949 = vunpack.c.l.b16 %v1878
        %v1950 = vunpack.c.l.b16 %v1879
        %v1951 = vunpack.c.l.b16 %v1880
        %v1952 = vunpack.c.l.b16 %v1881
        %v1953 = vunpack.c.l.b16 %v1882
        %v1954 = vunpack.c.l.b16 %v1883
        %v1955 = vunpack.c.l.b16 %v1884
        %v1956 = vunpack.c.l.b16 %v1885
        %v1957 = vunpack.c.l.b16 %v1886
        %v1958 = vunpack.c.l.b16 %v1887
        %v1959 = vunpack.c.l.b16 %v1888
        %v1960 = vpack.c.b16 %v1929, %v1928
        %v1961 = vpack.c.b16 %v1931, %v1930
        %v1962 = vpack.c.b16 %v1933, %v1932
        %v1963 = vpack.c.b16 %v1935, %v1934
        %v1964 = vpack.c.b16 %v1937, %v1936
        %v1965 = vpack.c.b16 %v1939, %v1938
        %v1966 = vpack.c.b16 %v1941, %v1940
        %v1967 = vpack.c.b16 %v1943, %v1942
        %v1968 = vpack.c.b16 %v1945, %v1944
        %v1969 = vpack.c.b16 %v1947, %v1946
        %v1970 = vpack.c.b16 %v1949, %v1948
        %v1971 = vpack.c.b16 %v1951, %v1950
        %v1972 = vpack.c.b16 %v1953, %v1952
        %v1973 = vpack.c.b16 %v1955, %v1954
        %v1974 = vpack.c.b16 %v1957, %v1956
        %v1975 = vpack.c.b16 %v1959, %v1958
        %1992 = vmatprep.subr.bf16.mxu0 0
        %1993 = vmatpush1.bf16.msra.mxu0 %v1967
        %1994 = vmatprep.subr.bf16.mxu0 0
        %1995 = vmatpush1.bf16.msra.mxu0 %v1966
        %1996 = vmatprep.subr.bf16.mxu0 0
        %1997 = vmatpush1.bf16.msra.mxu0 %v1965
        %1998 = vmatprep.subr.bf16.mxu0 0
        %1999 = vmatpush1.bf16.msra.mxu0 %v1964
        %2000 = vmatprep.subr.bf16.mxu0 0
        %2001 = vmatpush1.bf16.msra.mxu0 %v1963
        %2002 = vmatprep.subr.bf16.mxu0 0
        %2003 = vmatpush1.bf16.msra.mxu0 %v1962
        %2004 = vmatprep.subr.bf16.mxu0 0
        %2005 = vmatpush1.bf16.msra.mxu0 %v1961
        %2006 = vmatprep.subr.bf16.mxu0 0
        %2007 = vmatpush1.bf16.msra.mxu0 %v1960
        %2008 = vmatprep.subr.bf16.mxu0 0
        %2009 = vmatpush2.bf16.msra.mxu0 %v1975
        %2010 = vmatprep.subr.bf16.mxu0 0
        %2011 = vmatpush2.bf16.msra.mxu0 %v1974
        %2012 = vmatprep.subr.bf16.mxu0 0
        %2013 = vmatpush2.bf16.msra.mxu0 %v1973
        %2014 = vmatprep.subr.bf16.mxu0 0
        %2015 = vmatpush2.bf16.msra.mxu0 %v1972
        %2016 = vmatprep.subr.bf16.mxu0 0
        %2017 = vmatpush2.bf16.msra.mxu0 %v1971
        %2018 = vmatprep.subr.bf16.mxu0 0
        %2019 = vmatpush2.bf16.msra.mxu0 %v1970
        %2020 = vmatprep.subr.bf16.mxu0 0
        %2021 = vmatpush2.bf16.msra.mxu0 %v1969
        %2022 = vmatprep.subr.bf16.mxu0 0
        %2023 = vmatpush2.bf16.msra.mxu0 %v1968
        %2024 = vmatprep.mubr.bf16.mxu0 %v1856
        %2025 = vmatmul.mubr.bf16.gmra.mxu0 %v1855
        %v2026 = vpop.f32.mrf.mxu0
        %v2027 = vadd.f32 %v1894, %v2026
        %v2028 = vpop.f32.mrf.mxu0
        %v2029 = vpop.f32.mrf.mxu0
        %v2030 = vpop.f32.mrf.mxu0
        %2031 = vdwg.mxu0
        %v2032 = vadd.f32 %v1702, %v2027
        %v2033 = vld [vmem:[%s14] sm:$0x1]
        %v2034 = vld [vmem:[%s15] sm:$0x1]
        %2035 = vadd.xlane.f32.xlu0 %v2032
        %v2036 = vpop.xlane.xlu0 %2035
        %v2037 = vmul.f32 %v2036, %v1679
        %v2038 = vsub.f32 %v2032, %v2037
        %v2039 = vmul.f32 %v2038, %v2038
        %2040 = vadd.xlane.f32.xlu0 %v2039
        %v2041 = vpop.xlane.xlu0 %2040
        %v2042 = vmul.f32 %v2041, %v1679
        %v2043 = vadd.f32 %v2042, 1e-05
        %v2044 = vrsqrt.pop %v2043
        %v2045 = vmul.f32 %v2038, %v2044
        %v2047 = vlaneseq
        %v2048 = vshrl.u32 %v2047, 7
        %v2049 = vsub.s32 0, %v2048
        %v2050 = vrot.slane %v2033, %v2049
        %v2052 = vmul.f32 %v2045, %v2050
        %v2054 = vlaneseq
        %v2055 = vshrl.u32 %v2054, 7
        %v2056 = vsub.s32 0, %v2055
        %v2057 = vrot.slane %v2034, %v2056
        %v2059 = vadd.f32 %v2052, %v2057
        %2060 = vst [vmem:[%s665] sm:$0xff] %v2059
        %s2061 = sand.u32 %s406, 1
        %s2062 = scalar_lea.sflag [#allocation7], %s2061
        %s2063 = sand.u32 %s406, 1
        %s2064 = smul.addr %s2063, 8
        %s2065 = scalar_lea.vmem [#allocation17], %s2064
        // Predicated region
        $region117: #{tpu_custom_call.1} parent=83 // pred_check
          %p2066 = pneg %p416
        $region118: #{tpu_custom_call.1} parent=83 // pred_check_branch
          %2068 = sbr.rel (%p2066) target = $region120
        $region119: #{tpu_custom_call.1} parent=83 // pred_region
          %s2070 = ssub.s32 128, 128
          %2071 = vsyncadd %s2062, %s2070
          %s2072 = smul.addr %s42, 2
          %s2073 = sadd.s32 %s43, %s2072
          %s2074 = smul.addr %s2073, 128
          %s2075 = scalar_lea.hbm %s16, %s2074
          %s2077 = sshll.u32 %s2065, 4
          %s2078 = int_to_ptr.vmem [resolvable:$true] %s2077
          %2080 = dma.vmem_to_hbm [thread:$0]  %s2078, 128, %s2075, %s2062
        $region120: #{tpu_custom_call.1} parent=83 // pred_fallthru
          _
      $region84: #{tpu_custom_call.1} parent=5 // pred_fallthru
        _
      %p2081 = scmp.le.s32.totalorder 2, %s33
      // Predicated region
      $region121: #{tpu_custom_call.1} parent=5 // pred_check
        %p2082 = pneg %p2081
      $region122: #{tpu_custom_call.1} parent=5 // pred_check_branch
        %2084 = sbr.rel (%p2082) target = $region124
      $region123: #{tpu_custom_call.1} parent=5 // pred_region
        %s2085 = ssub.s32 %s33, 2
        // Predicated region
        $region125: #{tpu_custom_call.1} parent=123 // pred_check
          %p2086 = pneg %p422
        $region126: #{tpu_custom_call.1} parent=123 // pred_check_branch
          %2088 = sbr.rel (%p2086) target = $region128
        $region127: #{tpu_custom_call.1} parent=123 // pred_region
          %s2089 = sand.u32 %s407, 1
          %s2090 = scalar_lea.sflag [#allocation7], %s2089
          %s2091 = sand.u32 %s407, 1
          %s2092 = smul.addr %s2091, 8
          %s2093 = scalar_lea.vmem [#allocation17], %s2092
          %2094 = dma.done %s2090, 128
        $region128: #{tpu_custom_call.1} parent=123 // pred_fallthru
          _
      $region124: #{tpu_custom_call.1} parent=5 // pred_fallthru
        _
    $region6: #{tpu_custom_call.1} parent=1 // loop_footer
      %s37 = sadd.s32 1, %s33
    $region7: #{tpu_custom_call.1} parent=1 // loop_footer_branch
      %32 = sbr.rel target = $region3
    $region8: #{tpu_custom_call.1} parent=1 // loop_exit
      _
    %2095 = vsyncpa [#allocation6], 1
    %s2096 = scalar_lea.sflag [#allocation6], 1
    %2097 = vsyncpa %s2096, 1
    %2098 = vsyncpa [#allocation9], 1
    %s2099 = scalar_lea.sflag [#allocation9], 1
    %2100 = vsyncpa %s2099, 1
    %2101 = vsyncpa [#allocation12], 1
    %2102 = vsyncpa [#allocation15], 1
    %2103 = vsyncpa [#allocation7], 1
    %s2104 = scalar_lea.sflag [#allocation7], 1
    %2105 = vsyncpa %s2104, 1

</llo_original>
